<compile_context>
chip_gen: v6e
topology: v6e:2x2x1
jax: 0.10.0
libtpu: 0.0.40
codegen_flags: <defaults>
</compile_context>

<pallas_src>
import jax
import jax.numpy as jnp
from jax.experimental import pallas as pl
from jax.experimental.pallas import tpu as pltpu
import numpy as np


def _round_up(x, m):
    return -(-x // m) * m


# -----------------------------------------------------------------------------
# Pallas kernel: bidirectional, length-masked GRU + fc(hidden[-1])
# -----------------------------------------------------------------------------
def _make_kernel(T, bt, H, O_pad):
    H3 = 3 * H

    def kernel(mask_ref, x_ref, wih_ref, bih_ref, whh_ref, bhh_ref,
               wfc_ref, bfc_ref, out_ref):
        x = x_ref[0]                                   # (T*bt, H) bf16 (pre-cast)
        mask = mask_ref[...]                           # (bt, T)  f32, precomputed

        # Hoisted, direction+gate fused input projection: a single MXU pass
        # instead of 2*3*T per-step dots. Columns: [r_f z_f n_f | r_b z_b n_b].
        gi = (jnp.dot(x, wih_ref[...], preferred_element_type=jnp.float32)
              + bih_ref[...])                          # (T*bt, 6H) f32

        whh = whh_ref[...]                             # (2H, 6H) bf16 block-diag
        bhh = bhh_ref[...]                             # (1, 6H)  f32

        def cell(gi_t, gh_t, h):
            r = jax.nn.sigmoid(gi_t[:, 0:H] + gh_t[:, 0:H])
            z = jax.nn.sigmoid(gi_t[:, H:2 * H] + gh_t[:, H:2 * H])
            n = jnp.tanh(gi_t[:, 2 * H:H3] + r * gh_t[:, 2 * H:H3])
            return (1.0 - z) * n + z * h

        h_f = jnp.zeros((bt, H), jnp.float32)
        h_b = jnp.zeros((bt, H), jnp.float32)

        # Fully unrolled static time loop (T small here); fwd/bwd share ONE
        # fused hidden matmul per step via the block-diagonal W_hh.
        for t in range(T):
            tb = T - 1 - t
            h_cat = jnp.concatenate([h_f, h_b], axis=-1).astype(jnp.bfloat16)
            gh = (jnp.dot(h_cat, whh, preferred_element_type=jnp.float32)
                  + bhh)                               # (bt, 6H) f32
            hf_new = cell(gi[t * bt:(t + 1) * bt, 0:H3], gh[:, 0:H3], h_f)
            hb_new = cell(gi[tb * bt:(tb + 1) * bt, H3:], gh[:, H3:], h_b)
            # pack_padded semantics: only update while t < len (h0 == 0).
            m_f = mask[:, t:t + 1]
            m_b = mask[:, tb:tb + 1]
            h_f = h_f + m_f * (hf_new - h_f)
            h_b = h_b + m_b * (hb_new - h_b)

        # fc(hidden[-1]) -> backward-direction final hidden of the (only) layer.
        fc = (jnp.dot(h_b, wfc_ref[...], preferred_element_type=jnp.float32)
              + bfc_ref[...])                          # (bt, O_pad)

        # Single lane-dense store: [h_f | h_b | fc(+zero pad)] width = 128*k.
        out_ref[...] = jnp.concatenate([h_f, h_b, fc], axis=-1)

    return kernel


# -----------------------------------------------------------------------------
# Wrapper (glue: embedding gather, batch padding, weight fusion / packing)
# -----------------------------------------------------------------------------
def rnn_classifier_forward(input_ids, seq_lengths, params):
    """input_ids: (B, T) int32 token ids; seq_lengths: (B,) int32."""
    emb = params["embedding"][input_ids.T].astype(jnp.float32)   # (T, B, H)
    T, B, H = emb.shape
    O = params["fc_w"].shape[0]

    # Adaptive batch tile: fill the MXU sublanes up to 128, keep multiples of 8.
    B8 = _round_up(B, 8)
    if B8 <= 128:
        BT = B8
        Bp = B8
    else:
        BT = 128
        Bp = _round_up(B8, 128)
    NB = Bp // BT

    if Bp != B:
        emb = jnp.pad(emb, ((0, 0), (0, Bp - B), (0, 0)))
        seq_lengths = jnp.pad(seq_lengths, (0, Bp - B))   # padded rows: len 0
    lens = seq_lengths.astype(jnp.int32)

    # bf16 input slab, re-tiled so each batch tile is one contiguous lane-dense
    # (T*BT, H) block (no in-kernel reshape/cast; half the DMA bytes).
    x_tiles = (emb.astype(jnp.bfloat16)
                  .reshape(T, NB, BT, H)
                  .transpose(1, 0, 2, 3)
                  .reshape(NB, T * BT, H))

    # Precomputed length mask: compares hoisted out of the kernel's time loop.
    mask = (jnp.arange(T, dtype=jnp.int32)[None, :]
            < lens[:, None]).astype(jnp.float32)              # (Bp, T)

    # Direction+gate fused weights (PyTorch weights are (3H, H), gates r|z|n).
    wih_cat = jnp.concatenate([params["w_ih_f"].T, params["w_ih_b"].T],
                              axis=1).astype(jnp.bfloat16)    # (H, 6H)
    bih_cat = jnp.concatenate([params["b_ih_f"],
                               params["b_ih_b"]]).reshape(1, 6 * H)
    z3 = jnp.zeros((H, 3 * H), params["w_hh_f"].dtype)
    whh_cat = jnp.concatenate(                                # (2H, 6H) block-diag
        [jnp.concatenate([params["w_hh_f"].T, z3], axis=1),
         jnp.concatenate([z3, params["w_hh_b"].T], axis=1)],
        axis=0).astype(jnp.bfloat16)
    bhh_cat = jnp.concatenate([params["b_hh_f"],
                               params["b_hh_b"]]).reshape(1, 6 * H)

    # Lane-dense packed output slab: [h_f | h_b | fc(+pad)] width P = 128*k.
    P = _round_up(2 * H + O, 128)
    O_pad = P - 2 * H
    wfc = jnp.pad(params["fc_w"].T, ((0, 0), (0, O_pad - O)))  # (H, O_pad) f32
    bfc = jnp.pad(params["fc_b"], (0, O_pad - O)).reshape(1, O_pad)

    rep = lambda b: (0, 0)  # grid-invariant (weight/bias) blocks
    out = pl.pallas_call(
        _make_kernel(T, BT, H, O_pad),
        out_shape=jax.ShapeDtypeStruct((Bp, P), jnp.float32),
        grid=(NB,),
        in_specs=[
            pl.BlockSpec((BT, T), lambda b: (b, 0)),           # mask
            pl.BlockSpec((1, T * BT, H), lambda b: (b, 0, 0)),  # x tile (bf16)
            pl.BlockSpec((H, 6 * H), rep),                     # wih_cat
            pl.BlockSpec((1, 6 * H), rep),                     # bih_cat
            pl.BlockSpec((2 * H, 6 * H), rep),                 # whh_cat (block-diag)
            pl.BlockSpec((1, 6 * H), rep),                     # bhh_cat
            pl.BlockSpec((H, O_pad), rep),                     # wfc (lane-padded)
            pl.BlockSpec((1, O_pad), rep),                     # bfc (lane-padded)
        ],
        out_specs=pl.BlockSpec((BT, P), lambda b: (b, 0)),
        compiler_params=pltpu.CompilerParams(
            dimension_semantics=("parallel",)),
        # NOTE: at production H/T, add vmem_limit_bytes=... and consider
        # pipeline_mode=pl.Buffered(1) on the grid-invariant weight specs.
    )(mask, x_tiles, wih_cat, bih_cat, whh_cat, bhh_cat, wfc, bfc)

    h_f = out[:B, 0:H]
    h_b = out[:B, H:2 * H]
    fc_out = out[:B, 2 * H:2 * H + O]
    # hidden layout mirrors PyTorch: (n_layers * n_dir, B, H) = [fwd, bwd]
    hidden = jnp.stack([h_f, h_b], axis=0)
    return fc_out, hidden


# -----------------------------------------------------------------------------
# Pure-JAX reference (PyTorch GRU + pack_padded_sequence semantics)
# -----------------------------------------------------------------------------
def _reference(input_ids, seq_lengths, params):
    emb = params["embedding"][input_ids.T]                     # (T, B, H)
    T, B, H = emb.shape

    def run_dir(wih, whh, bih, bhh, reverse):
        h = jnp.zeros((B, H), jnp.float32)
        ts = range(T - 1, -1, -1) if reverse else range(T)
        for t in ts:
            x = emb[t]
            gi = x @ wih.T + bih
            gh = h @ whh.T + bhh
            r = jax.nn.sigmoid(gi[:, :H] + gh[:, :H])
            z = jax.nn.sigmoid(gi[:, H:2 * H] + gh[:, H:2 * H])
            n = jnp.tanh(gi[:, 2 * H:] + r * gh[:, 2 * H:])
            h_new = (1.0 - z) * n + z * h
            m = (t < seq_lengths).astype(jnp.float32)[:, None]
            h = m * h_new + (1.0 - m) * h
        return h

    h_f = run_dir(params["w_ih_f"], params["w_hh_f"], params["b_ih_f"],
                  params["b_hh_f"], reverse=False)
    h_b = run_dir(params["w_ih_b"], params["w_hh_b"], params["b_ih_b"],
                  params["b_hh_b"], reverse=True)
    fc_out = h_b @ params["fc_w"].T + params["fc_b"]
    return fc_out, jnp.stack([h_f, h_b], axis=0)


# -----------------------------------------------------------------------------
# Main
# -----------------------------------------------------------------------------
if __name__ == "__main__":
    VOCAB = 20        # input_size
    HIDDEN = 32       # hidden_size
    OUTPUT = 8        # output_size
    BATCH = 4
    SEQ = 8

    key = jax.random.PRNGKey(0)
    ks = jax.random.split(key, 12)

    def w(k, shape):
        return (0.1 * jax.random.normal(k, shape)).astype(jnp.float32)

    params = {
        "embedding": w(ks[0], (VOCAB, HIDDEN)),
        # GRU layer 0, forward direction
        "w_ih_f": w(ks[1], (3 * HIDDEN, HIDDEN)),
        "w_hh_f": w(ks[2], (3 * HIDDEN, HIDDEN)),
        "b_ih_f": w(ks[3], (3 * HIDDEN,)),
        "b_hh_f": w(ks[4], (3 * HIDDEN,)),
        # GRU layer 0, reverse direction
        "w_ih_b": w(ks[5], (3 * HIDDEN, HIDDEN)),
        "w_hh_b": w(ks[6], (3 * HIDDEN, HIDDEN)),
        "b_ih_b": w(ks[7], (3 * HIDDEN,)),
        "b_hh_b": w(ks[8], (3 * HIDDEN,)),
        # fc
        "fc_w": w(ks[9], (OUTPUT, HIDDEN)),
        "fc_b": w(ks[10], (OUTPUT,)),
    }

    input_ids = jax.random.randint(ks[11], (BATCH, SEQ), 0, VOCAB, dtype=jnp.int32)
    seq_lengths = jnp.array([8, 6, 4, 2], dtype=jnp.int32)   # descending (packed)

    fc_out, hidden = rnn_classifier_forward(input_ids, seq_lengths, params)
    fc_out = jax.block_until_ready(fc_out)
    hidden = jax.block_until_ready(hidden)

    ref_out, ref_hidden = _reference(input_ids, seq_lengths, params)
    # bf16 MXU operands in the recurrence -> slightly looser tolerance
    np.testing.assert_allclose(np.asarray(fc_out), np.asarray(ref_out),
                               rtol=2e-2, atol=2e-2)
    np.testing.assert_allclose(np.asarray(hidden), np.asarray(ref_hidden),
                               rtol=2e-2, atol=2e-2)

    print("KERNEL_OK")
</pallas_src>

<mosaic_0001>
module attributes {stable_mosaic.version = 11 : i64} {
  func.func @kernel(%arg0: i32, %arg1: memref<8x8xf32, #tpu.memory_space<vmem>>, %arg2: memref<1x64x32xbf16, #tpu.memory_space<vmem>>, %arg3: memref<32x192xbf16, #tpu.memory_space<vmem>>, %arg4: memref<1x192xf32, #tpu.memory_space<vmem>>, %arg5: memref<64x192xbf16, #tpu.memory_space<vmem>>, %arg6: memref<1x192xf32, #tpu.memory_space<vmem>>, %arg7: memref<32x64xf32, #tpu.memory_space<vmem>>, %arg8: memref<1x64xf32, #tpu.memory_space<vmem>>, %arg9: memref<8x128xf32, #tpu.memory_space<vmem>>) attributes {dimension_semantics = [#tpu.dimension_semantics<parallel>], iteration_bounds = array<i64: 1>, scalar_prefetch = 0 : i64, scratch_operands = 0 : i64, tpu.core_type = #tpu.core_type<tc>, window_params = [{transform_indices = @transform_0, window_bounds = array<i64: 8, 8>}, {transform_indices = @transform_1, window_bounds = array<i64: 1, 64, 32>}, {pipeline_mode = #tpu.pipeline_mode<synchronous>, transform_indices = @transform_2, window_bounds = array<i64: 32, 192>}, {pipeline_mode = #tpu.pipeline_mode<synchronous>, transform_indices = @transform_3, window_bounds = array<i64: 1, 192>}, {pipeline_mode = #tpu.pipeline_mode<synchronous>, transform_indices = @transform_4, window_bounds = array<i64: 64, 192>}, {pipeline_mode = #tpu.pipeline_mode<synchronous>, transform_indices = @transform_5, window_bounds = array<i64: 1, 192>}, {pipeline_mode = #tpu.pipeline_mode<synchronous>, transform_indices = @transform_6, window_bounds = array<i64: 32, 64>}, {pipeline_mode = #tpu.pipeline_mode<synchronous>, transform_indices = @transform_7, window_bounds = array<i64: 1, 64>}, {transform_indices = @transform_8, window_bounds = array<i64: 8, 128>}]} {
    %c0 = arith.constant 0 : index
    %c0_0 = arith.constant 0 : index
    %c0_1 = arith.constant 0 : index
    %0 = vector.load %arg2[%c0, %c0_0, %c0_1] : memref<1x64x32xbf16, #tpu.memory_space<vmem>>, vector<1x64x32xbf16>
    %1 = vector.shape_cast %0 : vector<1x64x32xbf16> to vector<64x32xbf16>
    %c0_2 = arith.constant 0 : index
    %c0_3 = arith.constant 0 : index
    %2 = vector.load %arg1[%c0_2, %c0_3] : memref<8x8xf32, #tpu.memory_space<vmem>>, vector<8x8xf32>
    %c0_4 = arith.constant 0 : index
    %c0_5 = arith.constant 0 : index
    %3 = vector.load %arg3[%c0_4, %c0_5] : memref<32x192xbf16, #tpu.memory_space<vmem>>, vector<32x192xbf16>
    %cst = arith.constant dense<0.000000e+00> : vector<64x192xf32>
    %4 = tpu.matmul %1, %3, %cst {dimension_numbers = #tpu.dot_dimension_numbers<[1], [0], [0], [1], [0, 0, 1, 1], [], []>} : vector<64x32xbf16>, vector<32x192xbf16>, vector<64x192xf32> -> vector<64x192xf32>
    %c0_6 = arith.constant 0 : index
    %c0_7 = arith.constant 0 : index
    %5 = vector.load %arg4[%c0_6, %c0_7] : memref<1x192xf32, #tpu.memory_space<vmem>>, vector<1x192xf32>
    %6 = vector.broadcast %5 : vector<1x192xf32> to vector<64x192xf32>
    %7 = arith.addf %4, %6 : vector<64x192xf32>
    %c0_8 = arith.constant 0 : index
    %c0_9 = arith.constant 0 : index
    %8 = vector.load %arg5[%c0_8, %c0_9] : memref<64x192xbf16, #tpu.memory_space<vmem>>, vector<64x192xbf16>
    %c0_10 = arith.constant 0 : index
    %c0_11 = arith.constant 0 : index
    %9 = vector.load %arg6[%c0_10, %c0_11] : memref<1x192xf32, #tpu.memory_space<vmem>>, vector<1x192xf32>
    %cst_12 = arith.constant 0.000000e+00 : f32
    %10 = vector.broadcast %cst_12 : f32 to vector<8x32xf32>
    %cst_13 = arith.constant 0.000000e+00 : f32
    %11 = vector.broadcast %cst_13 : f32 to vector<8x32xf32>
    %12 = tpu.concatenate %10, %11 in 1 : vector<8x32xf32>, vector<8x32xf32> -> vector<8x64xf32>
    %13 = arith.truncf %12 : vector<8x64xf32> to vector<8x64xbf16>
    %cst_14 = arith.constant dense<0.000000e+00> : vector<8x192xf32>
    %14 = tpu.matmul %13, %8, %cst_14 {dimension_numbers = #tpu.dot_dimension_numbers<[1], [0], [0], [1], [0, 0, 1, 1], [], []>} : vector<8x64xbf16>, vector<64x192xbf16>, vector<8x192xf32> -> vector<8x192xf32>
    %15 = vector.broadcast %9 : vector<1x192xf32> to vector<8x192xf32>
    %16 = arith.addf %14, %15 : vector<8x192xf32>
    %17 = vector.extract_strided_slice %7 {offsets = [0, 0], sizes = [8, 96], strides = [1, 1]} : vector<64x192xf32> to vector<8x96xf32>
    %18 = vector.extract_strided_slice %16 {offsets = [0, 0], sizes = [8, 96], strides = [1, 1]} : vector<8x192xf32> to vector<8x96xf32>
    %19 = vector.extract_strided_slice %17 {offsets = [0, 0], sizes = [8, 32], strides = [1, 1]} : vector<8x96xf32> to vector<8x32xf32>
    %20 = vector.extract_strided_slice %18 {offsets = [0, 0], sizes = [8, 32], strides = [1, 1]} : vector<8x96xf32> to vector<8x32xf32>
    %21 = arith.addf %19, %20 : vector<8x32xf32>
    %22 = arith.negf %21 : vector<8x32xf32>
    %23 = math.exp %22 : vector<8x32xf32>
    %cst_15 = arith.constant 1.000000e+00 : f32
    %24 = vector.broadcast %cst_15 : f32 to vector<8x32xf32>
    %25 = arith.addf %24, %23 : vector<8x32xf32>
    %26 = arith.divf %24, %25 : vector<8x32xf32>
    %27 = vector.extract_strided_slice %17 {offsets = [0, 32], sizes = [8, 32], strides = [1, 1]} : vector<8x96xf32> to vector<8x32xf32>
    %28 = vector.extract_strided_slice %18 {offsets = [0, 32], sizes = [8, 32], strides = [1, 1]} : vector<8x96xf32> to vector<8x32xf32>
    %29 = arith.addf %27, %28 : vector<8x32xf32>
    %30 = arith.negf %29 : vector<8x32xf32>
    %31 = math.exp %30 : vector<8x32xf32>
    %cst_16 = arith.constant 1.000000e+00 : f32
    %32 = vector.broadcast %cst_16 : f32 to vector<8x32xf32>
    %33 = arith.addf %32, %31 : vector<8x32xf32>
    %34 = arith.divf %32, %33 : vector<8x32xf32>
    %35 = vector.extract_strided_slice %17 {offsets = [0, 64], sizes = [8, 32], strides = [1, 1]} : vector<8x96xf32> to vector<8x32xf32>
    %36 = vector.extract_strided_slice %18 {offsets = [0, 64], sizes = [8, 32], strides = [1, 1]} : vector<8x96xf32> to vector<8x32xf32>
    %37 = arith.mulf %26, %36 : vector<8x32xf32>
    %38 = arith.addf %35, %37 : vector<8x32xf32>
    %39 = math.tanh %38 : vector<8x32xf32>
    %cst_17 = arith.constant 1.000000e+00 : f32
    %40 = vector.broadcast %cst_17 : f32 to vector<8x32xf32>
    %41 = arith.subf %40, %34 : vector<8x32xf32>
    %42 = arith.mulf %41, %39 : vector<8x32xf32>
    %43 = arith.mulf %34, %10 : vector<8x32xf32>
    %44 = arith.addf %42, %43 : vector<8x32xf32>
    %45 = vector.extract_strided_slice %7 {offsets = [56, 96], sizes = [8, 96], strides = [1, 1]} : vector<64x192xf32> to vector<8x96xf32>
    %46 = vector.extract_strided_slice %16 {offsets = [0, 96], sizes = [8, 96], strides = [1, 1]} : vector<8x192xf32> to vector<8x96xf32>
    %47 = vector.extract_strided_slice %45 {offsets = [0, 0], sizes = [8, 32], strides = [1, 1]} : vector<8x96xf32> to vector<8x32xf32>
    %48 = vector.extract_strided_slice %46 {offsets = [0, 0], sizes = [8, 32], strides = [1, 1]} : vector<8x96xf32> to vector<8x32xf32>
    %49 = arith.addf %47, %48 : vector<8x32xf32>
    %50 = arith.negf %49 : vector<8x32xf32>
    %51 = math.exp %50 : vector<8x32xf32>
    %cst_18 = arith.constant 1.000000e+00 : f32
    %52 = vector.broadcast %cst_18 : f32 to vector<8x32xf32>
    %53 = arith.addf %52, %51 : vector<8x32xf32>
    %54 = arith.divf %52, %53 : vector<8x32xf32>
    %55 = vector.extract_strided_slice %45 {offsets = [0, 32], sizes = [8, 32], strides = [1, 1]} : vector<8x96xf32> to vector<8x32xf32>
    %56 = vector.extract_strided_slice %46 {offsets = [0, 32], sizes = [8, 32], strides = [1, 1]} : vector<8x96xf32> to vector<8x32xf32>
    %57 = arith.addf %55, %56 : vector<8x32xf32>
    %58 = arith.negf %57 : vector<8x32xf32>
    %59 = math.exp %58 : vector<8x32xf32>
    %cst_19 = arith.constant 1.000000e+00 : f32
    %60 = vector.broadcast %cst_19 : f32 to vector<8x32xf32>
    %61 = arith.addf %60, %59 : vector<8x32xf32>
    %62 = arith.divf %60, %61 : vector<8x32xf32>
    %63 = vector.extract_strided_slice %45 {offsets = [0, 64], sizes = [8, 32], strides = [1, 1]} : vector<8x96xf32> to vector<8x32xf32>
    %64 = vector.extract_strided_slice %46 {offsets = [0, 64], sizes = [8, 32], strides = [1, 1]} : vector<8x96xf32> to vector<8x32xf32>
    %65 = arith.mulf %54, %64 : vector<8x32xf32>
    %66 = arith.addf %63, %65 : vector<8x32xf32>
    %67 = math.tanh %66 : vector<8x32xf32>
    %cst_20 = arith.constant 1.000000e+00 : f32
    %68 = vector.broadcast %cst_20 : f32 to vector<8x32xf32>
    %69 = arith.subf %68, %62 : vector<8x32xf32>
    %70 = arith.mulf %69, %67 : vector<8x32xf32>
    %71 = arith.mulf %62, %11 : vector<8x32xf32>
    %72 = arith.addf %70, %71 : vector<8x32xf32>
    %73 = vector.extract_strided_slice %2 {offsets = [0, 0], sizes = [8, 1], strides = [1, 1]} : vector<8x8xf32> to vector<8x1xf32>
    %74 = vector.extract_strided_slice %2 {offsets = [0, 7], sizes = [8, 1], strides = [1, 1]} : vector<8x8xf32> to vector<8x1xf32>
    %75 = arith.subf %44, %10 : vector<8x32xf32>
    %76 = vector.broadcast %73 : vector<8x1xf32> to vector<8x32xf32>
    %77 = arith.mulf %76, %75 : vector<8x32xf32>
    %78 = arith.addf %10, %77 : vector<8x32xf32>
    %79 = arith.subf %72, %11 : vector<8x32xf32>
    %80 = vector.broadcast %74 : vector<8x1xf32> to vector<8x32xf32>
    %81 = arith.mulf %80, %79 : vector<8x32xf32>
    %82 = arith.addf %11, %81 : vector<8x32xf32>
    %83 = tpu.concatenate %78, %82 in 1 : vector<8x32xf32>, vector<8x32xf32> -> vector<8x64xf32>
    %84 = arith.truncf %83 : vector<8x64xf32> to vector<8x64xbf16>
    %cst_21 = arith.constant dense<0.000000e+00> : vector<8x192xf32>
    %85 = tpu.matmul %84, %8, %cst_21 {dimension_numbers = #tpu.dot_dimension_numbers<[1], [0], [0], [1], [0, 0, 1, 1], [], []>} : vector<8x64xbf16>, vector<64x192xbf16>, vector<8x192xf32> -> vector<8x192xf32>
    %86 = vector.broadcast %9 : vector<1x192xf32> to vector<8x192xf32>
    %87 = arith.addf %85, %86 : vector<8x192xf32>
    %88 = vector.extract_strided_slice %7 {offsets = [8, 0], sizes = [8, 96], strides = [1, 1]} : vector<64x192xf32> to vector<8x96xf32>
    %89 = vector.extract_strided_slice %87 {offsets = [0, 0], sizes = [8, 96], strides = [1, 1]} : vector<8x192xf32> to vector<8x96xf32>
    %90 = vector.extract_strided_slice %88 {offsets = [0, 0], sizes = [8, 32], strides = [1, 1]} : vector<8x96xf32> to vector<8x32xf32>
    %91 = vector.extract_strided_slice %89 {offsets = [0, 0], sizes = [8, 32], strides = [1, 1]} : vector<8x96xf32> to vector<8x32xf32>
    %92 = arith.addf %90, %91 : vector<8x32xf32>
    %93 = arith.negf %92 : vector<8x32xf32>
    %94 = math.exp %93 : vector<8x32xf32>
    %cst_22 = arith.constant 1.000000e+00 : f32
    %95 = vector.broadcast %cst_22 : f32 to vector<8x32xf32>
    %96 = arith.addf %95, %94 : vector<8x32xf32>
    %97 = arith.divf %95, %96 : vector<8x32xf32>
    %98 = vector.extract_strided_slice %88 {offsets = [0, 32], sizes = [8, 32], strides = [1, 1]} : vector<8x96xf32> to vector<8x32xf32>
    %99 = vector.extract_strided_slice %89 {offsets = [0, 32], sizes = [8, 32], strides = [1, 1]} : vector<8x96xf32> to vector<8x32xf32>
    %100 = arith.addf %98, %99 : vector<8x32xf32>
    %101 = arith.negf %100 : vector<8x32xf32>
    %102 = math.exp %101 : vector<8x32xf32>
    %cst_23 = arith.constant 1.000000e+00 : f32
    %103 = vector.broadcast %cst_23 : f32 to vector<8x32xf32>
    %104 = arith.addf %103, %102 : vector<8x32xf32>
    %105 = arith.divf %103, %104 : vector<8x32xf32>
    %106 = vector.extract_strided_slice %88 {offsets = [0, 64], sizes = [8, 32], strides = [1, 1]} : vector<8x96xf32> to vector<8x32xf32>
    %107 = vector.extract_strided_slice %89 {offsets = [0, 64], sizes = [8, 32], strides = [1, 1]} : vector<8x96xf32> to vector<8x32xf32>
    %108 = arith.mulf %97, %107 : vector<8x32xf32>
    %109 = arith.addf %106, %108 : vector<8x32xf32>
    %110 = math.tanh %109 : vector<8x32xf32>
    %cst_24 = arith.constant 1.000000e+00 : f32
    %111 = vector.broadcast %cst_24 : f32 to vector<8x32xf32>
    %112 = arith.subf %111, %105 : vector<8x32xf32>
    %113 = arith.mulf %112, %110 : vector<8x32xf32>
    %114 = arith.mulf %105, %78 : vector<8x32xf32>
    %115 = arith.addf %113, %114 : vector<8x32xf32>
    %116 = vector.extract_strided_slice %7 {offsets = [48, 96], sizes = [8, 96], strides = [1, 1]} : vector<64x192xf32> to vector<8x96xf32>
    %117 = vector.extract_strided_slice %87 {offsets = [0, 96], sizes = [8, 96], strides = [1, 1]} : vector<8x192xf32> to vector<8x96xf32>
    %118 = vector.extract_strided_slice %116 {offsets = [0, 0], sizes = [8, 32], strides = [1, 1]} : vector<8x96xf32> to vector<8x32xf32>
    %119 = vector.extract_strided_slice %117 {offsets = [0, 0], sizes = [8, 32], strides = [1, 1]} : vector<8x96xf32> to vector<8x32xf32>
    %120 = arith.addf %118, %119 : vector<8x32xf32>
    %121 = arith.negf %120 : vector<8x32xf32>
    %122 = math.exp %121 : vector<8x32xf32>
    %cst_25 = arith.constant 1.000000e+00 : f32
    %123 = vector.broadcast %cst_25 : f32 to vector<8x32xf32>
    %124 = arith.addf %123, %122 : vector<8x32xf32>
    %125 = arith.divf %123, %124 : vector<8x32xf32>
    %126 = vector.extract_strided_slice %116 {offsets = [0, 32], sizes = [8, 32], strides = [1, 1]} : vector<8x96xf32> to vector<8x32xf32>
    %127 = vector.extract_strided_slice %117 {offsets = [0, 32], sizes = [8, 32], strides = [1, 1]} : vector<8x96xf32> to vector<8x32xf32>
    %128 = arith.addf %126, %127 : vector<8x32xf32>
    %129 = arith.negf %128 : vector<8x32xf32>
    %130 = math.exp %129 : vector<8x32xf32>
    %cst_26 = arith.constant 1.000000e+00 : f32
    %131 = vector.broadcast %cst_26 : f32 to vector<8x32xf32>
    %132 = arith.addf %131, %130 : vector<8x32xf32>
    %133 = arith.divf %131, %132 : vector<8x32xf32>
    %134 = vector.extract_strided_slice %116 {offsets = [0, 64], sizes = [8, 32], strides = [1, 1]} : vector<8x96xf32> to vector<8x32xf32>
    %135 = vector.extract_strided_slice %117 {offsets = [0, 64], sizes = [8, 32], strides = [1, 1]} : vector<8x96xf32> to vector<8x32xf32>
    %136 = arith.mulf %125, %135 : vector<8x32xf32>
    %137 = arith.addf %134, %136 : vector<8x32xf32>
    %138 = math.tanh %137 : vector<8x32xf32>
    %cst_27 = arith.constant 1.000000e+00 : f32
    %139 = vector.broadcast %cst_27 : f32 to vector<8x32xf32>
    %140 = arith.subf %139, %133 : vector<8x32xf32>
    %141 = arith.mulf %140, %138 : vector<8x32xf32>
    %142 = arith.mulf %133, %82 : vector<8x32xf32>
    %143 = arith.addf %141, %142 : vector<8x32xf32>
    %144 = vector.extract_strided_slice %2 {offsets = [0, 1], sizes = [8, 1], strides = [1, 1]} : vector<8x8xf32> to vector<8x1xf32>
    %145 = vector.extract_strided_slice %2 {offsets = [0, 6], sizes = [8, 1], strides = [1, 1]} : vector<8x8xf32> to vector<8x1xf32>
    %146 = arith.subf %115, %78 : vector<8x32xf32>
    %147 = vector.broadcast %144 : vector<8x1xf32> to vector<8x32xf32>
    %148 = arith.mulf %147, %146 : vector<8x32xf32>
    %149 = arith.addf %78, %148 : vector<8x32xf32>
    %150 = arith.subf %143, %82 : vector<8x32xf32>
    %151 = vector.broadcast %145 : vector<8x1xf32> to vector<8x32xf32>
    %152 = arith.mulf %151, %150 : vector<8x32xf32>
    %153 = arith.addf %82, %152 : vector<8x32xf32>
    %154 = tpu.concatenate %149, %153 in 1 : vector<8x32xf32>, vector<8x32xf32> -> vector<8x64xf32>
    %155 = arith.truncf %154 : vector<8x64xf32> to vector<8x64xbf16>
    %cst_28 = arith.constant dense<0.000000e+00> : vector<8x192xf32>
    %156 = tpu.matmul %155, %8, %cst_28 {dimension_numbers = #tpu.dot_dimension_numbers<[1], [0], [0], [1], [0, 0, 1, 1], [], []>} : vector<8x64xbf16>, vector<64x192xbf16>, vector<8x192xf32> -> vector<8x192xf32>
    %157 = vector.broadcast %9 : vector<1x192xf32> to vector<8x192xf32>
    %158 = arith.addf %156, %157 : vector<8x192xf32>
    %159 = vector.extract_strided_slice %7 {offsets = [16, 0], sizes = [8, 96], strides = [1, 1]} : vector<64x192xf32> to vector<8x96xf32>
    %160 = vector.extract_strided_slice %158 {offsets = [0, 0], sizes = [8, 96], strides = [1, 1]} : vector<8x192xf32> to vector<8x96xf32>
    %161 = vector.extract_strided_slice %159 {offsets = [0, 0], sizes = [8, 32], strides = [1, 1]} : vector<8x96xf32> to vector<8x32xf32>
    %162 = vector.extract_strided_slice %160 {offsets = [0, 0], sizes = [8, 32], strides = [1, 1]} : vector<8x96xf32> to vector<8x32xf32>
    %163 = arith.addf %161, %162 : vector<8x32xf32>
    %164 = arith.negf %163 : vector<8x32xf32>
    %165 = math.exp %164 : vector<8x32xf32>
    %cst_29 = arith.constant 1.000000e+00 : f32
    %166 = vector.broadcast %cst_29 : f32 to vector<8x32xf32>
    %167 = arith.addf %166, %165 : vector<8x32xf32>
    %168 = arith.divf %166, %167 : vector<8x32xf32>
    %169 = vector.extract_strided_slice %159 {offsets = [0, 32], sizes = [8, 32], strides = [1, 1]} : vector<8x96xf32> to vector<8x32xf32>
    %170 = vector.extract_strided_slice %160 {offsets = [0, 32], sizes = [8, 32], strides = [1, 1]} : vector<8x96xf32> to vector<8x32xf32>
    %171 = arith.addf %169, %170 : vector<8x32xf32>
    %172 = arith.negf %171 : vector<8x32xf32>
    %173 = math.exp %172 : vector<8x32xf32>
    %cst_30 = arith.constant 1.000000e+00 : f32
    %174 = vector.broadcast %cst_30 : f32 to vector<8x32xf32>
    %175 = arith.addf %174, %173 : vector<8x32xf32>
    %176 = arith.divf %174, %175 : vector<8x32xf32>
    %177 = vector.extract_strided_slice %159 {offsets = [0, 64], sizes = [8, 32], strides = [1, 1]} : vector<8x96xf32> to vector<8x32xf32>
    %178 = vector.extract_strided_slice %160 {offsets = [0, 64], sizes = [8, 32], strides = [1, 1]} : vector<8x96xf32> to vector<8x32xf32>
    %179 = arith.mulf %168, %178 : vector<8x32xf32>
    %180 = arith.addf %177, %179 : vector<8x32xf32>
    %181 = math.tanh %180 : vector<8x32xf32>
    %cst_31 = arith.constant 1.000000e+00 : f32
    %182 = vector.broadcast %cst_31 : f32 to vector<8x32xf32>
    %183 = arith.subf %182, %176 : vector<8x32xf32>
    %184 = arith.mulf %183, %181 : vector<8x32xf32>
    %185 = arith.mulf %176, %149 : vector<8x32xf32>
    %186 = arith.addf %184, %185 : vector<8x32xf32>
    %187 = vector.extract_strided_slice %7 {offsets = [40, 96], sizes = [8, 96], strides = [1, 1]} : vector<64x192xf32> to vector<8x96xf32>
    %188 = vector.extract_strided_slice %158 {offsets = [0, 96], sizes = [8, 96], strides = [1, 1]} : vector<8x192xf32> to vector<8x96xf32>
    %189 = vector.extract_strided_slice %187 {offsets = [0, 0], sizes = [8, 32], strides = [1, 1]} : vector<8x96xf32> to vector<8x32xf32>
    %190 = vector.extract_strided_slice %188 {offsets = [0, 0], sizes = [8, 32], strides = [1, 1]} : vector<8x96xf32> to vector<8x32xf32>
    %191 = arith.addf %189, %190 : vector<8x32xf32>
    %192 = arith.negf %191 : vector<8x32xf32>
    %193 = math.exp %192 : vector<8x32xf32>
    %cst_32 = arith.constant 1.000000e+00 : f32
    %194 = vector.broadcast %cst_32 : f32 to vector<8x32xf32>
    %195 = arith.addf %194, %193 : vector<8x32xf32>
    %196 = arith.divf %194, %195 : vector<8x32xf32>
    %197 = vector.extract_strided_slice %187 {offsets = [0, 32], sizes = [8, 32], strides = [1, 1]} : vector<8x96xf32> to vector<8x32xf32>
    %198 = vector.extract_strided_slice %188 {offsets = [0, 32], sizes = [8, 32], strides = [1, 1]} : vector<8x96xf32> to vector<8x32xf32>
    %199 = arith.addf %197, %198 : vector<8x32xf32>
    %200 = arith.negf %199 : vector<8x32xf32>
    %201 = math.exp %200 : vector<8x32xf32>
    %cst_33 = arith.constant 1.000000e+00 : f32
    %202 = vector.broadcast %cst_33 : f32 to vector<8x32xf32>
    %203 = arith.addf %202, %201 : vector<8x32xf32>
    %204 = arith.divf %202, %203 : vector<8x32xf32>
    %205 = vector.extract_strided_slice %187 {offsets = [0, 64], sizes = [8, 32], strides = [1, 1]} : vector<8x96xf32> to vector<8x32xf32>
    %206 = vector.extract_strided_slice %188 {offsets = [0, 64], sizes = [8, 32], strides = [1, 1]} : vector<8x96xf32> to vector<8x32xf32>
    %207 = arith.mulf %196, %206 : vector<8x32xf32>
    %208 = arith.addf %205, %207 : vector<8x32xf32>
    %209 = math.tanh %208 : vector<8x32xf32>
    %cst_34 = arith.constant 1.000000e+00 : f32
    %210 = vector.broadcast %cst_34 : f32 to vector<8x32xf32>
    %211 = arith.subf %210, %204 : vector<8x32xf32>
    %212 = arith.mulf %211, %209 : vector<8x32xf32>
    %213 = arith.mulf %204, %153 : vector<8x32xf32>
    %214 = arith.addf %212, %213 : vector<8x32xf32>
    %215 = vector.extract_strided_slice %2 {offsets = [0, 2], sizes = [8, 1], strides = [1, 1]} : vector<8x8xf32> to vector<8x1xf32>
    %216 = vector.extract_strided_slice %2 {offsets = [0, 5], sizes = [8, 1], strides = [1, 1]} : vector<8x8xf32> to vector<8x1xf32>
    %217 = arith.subf %186, %149 : vector<8x32xf32>
    %218 = vector.broadcast %215 : vector<8x1xf32> to vector<8x32xf32>
    %219 = arith.mulf %218, %217 : vector<8x32xf32>
    %220 = arith.addf %149, %219 : vector<8x32xf32>
    %221 = arith.subf %214, %153 : vector<8x32xf32>
    %222 = vector.broadcast %216 : vector<8x1xf32> to vector<8x32xf32>
    %223 = arith.mulf %222, %221 : vector<8x32xf32>
    %224 = arith.addf %153, %223 : vector<8x32xf32>
    %225 = tpu.concatenate %220, %224 in 1 : vector<8x32xf32>, vector<8x32xf32> -> vector<8x64xf32>
    %226 = arith.truncf %225 : vector<8x64xf32> to vector<8x64xbf16>
    %cst_35 = arith.constant dense<0.000000e+00> : vector<8x192xf32>
    %227 = tpu.matmul %226, %8, %cst_35 {dimension_numbers = #tpu.dot_dimension_numbers<[1], [0], [0], [1], [0, 0, 1, 1], [], []>} : vector<8x64xbf16>, vector<64x192xbf16>, vector<8x192xf32> -> vector<8x192xf32>
    %228 = vector.broadcast %9 : vector<1x192xf32> to vector<8x192xf32>
    %229 = arith.addf %227, %228 : vector<8x192xf32>
    %230 = vector.extract_strided_slice %7 {offsets = [24, 0], sizes = [8, 96], strides = [1, 1]} : vector<64x192xf32> to vector<8x96xf32>
    %231 = vector.extract_strided_slice %229 {offsets = [0, 0], sizes = [8, 96], strides = [1, 1]} : vector<8x192xf32> to vector<8x96xf32>
    %232 = vector.extract_strided_slice %230 {offsets = [0, 0], sizes = [8, 32], strides = [1, 1]} : vector<8x96xf32> to vector<8x32xf32>
    %233 = vector.extract_strided_slice %231 {offsets = [0, 0], sizes = [8, 32], strides = [1, 1]} : vector<8x96xf32> to vector<8x32xf32>
    %234 = arith.addf %232, %233 : vector<8x32xf32>
    %235 = arith.negf %234 : vector<8x32xf32>
    %236 = math.exp %235 : vector<8x32xf32>
    %cst_36 = arith.constant 1.000000e+00 : f32
    %237 = vector.broadcast %cst_36 : f32 to vector<8x32xf32>
    %238 = arith.addf %237, %236 : vector<8x32xf32>
    %239 = arith.divf %237, %238 : vector<8x32xf32>
    %240 = vector.extract_strided_slice %230 {offsets = [0, 32], sizes = [8, 32], strides = [1, 1]} : vector<8x96xf32> to vector<8x32xf32>
    %241 = vector.extract_strided_slice %231 {offsets = [0, 32], sizes = [8, 32], strides = [1, 1]} : vector<8x96xf32> to vector<8x32xf32>
    %242 = arith.addf %240, %241 : vector<8x32xf32>
    %243 = arith.negf %242 : vector<8x32xf32>
    %244 = math.exp %243 : vector<8x32xf32>
    %cst_37 = arith.constant 1.000000e+00 : f32
    %245 = vector.broadcast %cst_37 : f32 to vector<8x32xf32>
    %246 = arith.addf %245, %244 : vector<8x32xf32>
    %247 = arith.divf %245, %246 : vector<8x32xf32>
    %248 = vector.extract_strided_slice %230 {offsets = [0, 64], sizes = [8, 32], strides = [1, 1]} : vector<8x96xf32> to vector<8x32xf32>
    %249 = vector.extract_strided_slice %231 {offsets = [0, 64], sizes = [8, 32], strides = [1, 1]} : vector<8x96xf32> to vector<8x32xf32>
    %250 = arith.mulf %239, %249 : vector<8x32xf32>
    %251 = arith.addf %248, %250 : vector<8x32xf32>
    %252 = math.tanh %251 : vector<8x32xf32>
    %cst_38 = arith.constant 1.000000e+00 : f32
    %253 = vector.broadcast %cst_38 : f32 to vector<8x32xf32>
    %254 = arith.subf %253, %247 : vector<8x32xf32>
    %255 = arith.mulf %254, %252 : vector<8x32xf32>
    %256 = arith.mulf %247, %220 : vector<8x32xf32>
    %257 = arith.addf %255, %256 : vector<8x32xf32>
    %258 = vector.extract_strided_slice %7 {offsets = [32, 96], sizes = [8, 96], strides = [1, 1]} : vector<64x192xf32> to vector<8x96xf32>
    %259 = vector.extract_strided_slice %229 {offsets = [0, 96], sizes = [8, 96], strides = [1, 1]} : vector<8x192xf32> to vector<8x96xf32>
    %260 = vector.extract_strided_slice %258 {offsets = [0, 0], sizes = [8, 32], strides = [1, 1]} : vector<8x96xf32> to vector<8x32xf32>
    %261 = vector.extract_strided_slice %259 {offsets = [0, 0], sizes = [8, 32], strides = [1, 1]} : vector<8x96xf32> to vector<8x32xf32>
    %262 = arith.addf %260, %261 : vector<8x32xf32>
    %263 = arith.negf %262 : vector<8x32xf32>
    %264 = math.exp %263 : vector<8x32xf32>
    %cst_39 = arith.constant 1.000000e+00 : f32
    %265 = vector.broadcast %cst_39 : f32 to vector<8x32xf32>
    %266 = arith.addf %265, %264 : vector<8x32xf32>
    %267 = arith.divf %265, %266 : vector<8x32xf32>
    %268 = vector.extract_strided_slice %258 {offsets = [0, 32], sizes = [8, 32], strides = [1, 1]} : vector<8x96xf32> to vector<8x32xf32>
    %269 = vector.extract_strided_slice %259 {offsets = [0, 32], sizes = [8, 32], strides = [1, 1]} : vector<8x96xf32> to vector<8x32xf32>
    %270 = arith.addf %268, %269 : vector<8x32xf32>
    %271 = arith.negf %270 : vector<8x32xf32>
    %272 = math.exp %271 : vector<8x32xf32>
    %cst_40 = arith.constant 1.000000e+00 : f32
    %273 = vector.broadcast %cst_40 : f32 to vector<8x32xf32>
    %274 = arith.addf %273, %272 : vector<8x32xf32>
    %275 = arith.divf %273, %274 : vector<8x32xf32>
    %276 = vector.extract_strided_slice %258 {offsets = [0, 64], sizes = [8, 32], strides = [1, 1]} : vector<8x96xf32> to vector<8x32xf32>
    %277 = vector.extract_strided_slice %259 {offsets = [0, 64], sizes = [8, 32], strides = [1, 1]} : vector<8x96xf32> to vector<8x32xf32>
    %278 = arith.mulf %267, %277 : vector<8x32xf32>
    %279 = arith.addf %276, %278 : vector<8x32xf32>
    %280 = math.tanh %279 : vector<8x32xf32>
    %cst_41 = arith.constant 1.000000e+00 : f32
    %281 = vector.broadcast %cst_41 : f32 to vector<8x32xf32>
    %282 = arith.subf %281, %275 : vector<8x32xf32>
    %283 = arith.mulf %282, %280 : vector<8x32xf32>
    %284 = arith.mulf %275, %224 : vector<8x32xf32>
    %285 = arith.addf %283, %284 : vector<8x32xf32>
    %286 = vector.extract_strided_slice %2 {offsets = [0, 3], sizes = [8, 1], strides = [1, 1]} : vector<8x8xf32> to vector<8x1xf32>
    %287 = vector.extract_strided_slice %2 {offsets = [0, 4], sizes = [8, 1], strides = [1, 1]} : vector<8x8xf32> to vector<8x1xf32>
    %288 = arith.subf %257, %220 : vector<8x32xf32>
    %289 = vector.broadcast %286 : vector<8x1xf32> to vector<8x32xf32>
    %290 = arith.mulf %289, %288 : vector<8x32xf32>
    %291 = arith.addf %220, %290 : vector<8x32xf32>
    %292 = arith.subf %285, %224 : vector<8x32xf32>
    %293 = vector.broadcast %287 : vector<8x1xf32> to vector<8x32xf32>
    %294 = arith.mulf %293, %292 : vector<8x32xf32>
    %295 = arith.addf %224, %294 : vector<8x32xf32>
    %296 = tpu.concatenate %291, %295 in 1 : vector<8x32xf32>, vector<8x32xf32> -> vector<8x64xf32>
    %297 = arith.truncf %296 : vector<8x64xf32> to vector<8x64xbf16>
    %cst_42 = arith.constant dense<0.000000e+00> : vector<8x192xf32>
    %298 = tpu.matmul %297, %8, %cst_42 {dimension_numbers = #tpu.dot_dimension_numbers<[1], [0], [0], [1], [0, 0, 1, 1], [], []>} : vector<8x64xbf16>, vector<64x192xbf16>, vector<8x192xf32> -> vector<8x192xf32>
    %299 = vector.broadcast %9 : vector<1x192xf32> to vector<8x192xf32>
    %300 = arith.addf %298, %299 : vector<8x192xf32>
    %301 = vector.extract_strided_slice %7 {offsets = [32, 0], sizes = [8, 96], strides = [1, 1]} : vector<64x192xf32> to vector<8x96xf32>
    %302 = vector.extract_strided_slice %300 {offsets = [0, 0], sizes = [8, 96], strides = [1, 1]} : vector<8x192xf32> to vector<8x96xf32>
    %303 = vector.extract_strided_slice %301 {offsets = [0, 0], sizes = [8, 32], strides = [1, 1]} : vector<8x96xf32> to vector<8x32xf32>
    %304 = vector.extract_strided_slice %302 {offsets = [0, 0], sizes = [8, 32], strides = [1, 1]} : vector<8x96xf32> to vector<8x32xf32>
    %305 = arith.addf %303, %304 : vector<8x32xf32>
    %306 = arith.negf %305 : vector<8x32xf32>
    %307 = math.exp %306 : vector<8x32xf32>
    %cst_43 = arith.constant 1.000000e+00 : f32
    %308 = vector.broadcast %cst_43 : f32 to vector<8x32xf32>
    %309 = arith.addf %308, %307 : vector<8x32xf32>
    %310 = arith.divf %308, %309 : vector<8x32xf32>
    %311 = vector.extract_strided_slice %301 {offsets = [0, 32], sizes = [8, 32], strides = [1, 1]} : vector<8x96xf32> to vector<8x32xf32>
    %312 = vector.extract_strided_slice %302 {offsets = [0, 32], sizes = [8, 32], strides = [1, 1]} : vector<8x96xf32> to vector<8x32xf32>
    %313 = arith.addf %311, %312 : vector<8x32xf32>
    %314 = arith.negf %313 : vector<8x32xf32>
    %315 = math.exp %314 : vector<8x32xf32>
    %cst_44 = arith.constant 1.000000e+00 : f32
    %316 = vector.broadcast %cst_44 : f32 to vector<8x32xf32>
    %317 = arith.addf %316, %315 : vector<8x32xf32>
    %318 = arith.divf %316, %317 : vector<8x32xf32>
    %319 = vector.extract_strided_slice %301 {offsets = [0, 64], sizes = [8, 32], strides = [1, 1]} : vector<8x96xf32> to vector<8x32xf32>
    %320 = vector.extract_strided_slice %302 {offsets = [0, 64], sizes = [8, 32], strides = [1, 1]} : vector<8x96xf32> to vector<8x32xf32>
    %321 = arith.mulf %310, %320 : vector<8x32xf32>
    %322 = arith.addf %319, %321 : vector<8x32xf32>
    %323 = math.tanh %322 : vector<8x32xf32>
    %cst_45 = arith.constant 1.000000e+00 : f32
    %324 = vector.broadcast %cst_45 : f32 to vector<8x32xf32>
    %325 = arith.subf %324, %318 : vector<8x32xf32>
    %326 = arith.mulf %325, %323 : vector<8x32xf32>
    %327 = arith.mulf %318, %291 : vector<8x32xf32>
    %328 = arith.addf %326, %327 : vector<8x32xf32>
    %329 = vector.extract_strided_slice %7 {offsets = [24, 96], sizes = [8, 96], strides = [1, 1]} : vector<64x192xf32> to vector<8x96xf32>
    %330 = vector.extract_strided_slice %300 {offsets = [0, 96], sizes = [8, 96], strides = [1, 1]} : vector<8x192xf32> to vector<8x96xf32>
    %331 = vector.extract_strided_slice %329 {offsets = [0, 0], sizes = [8, 32], strides = [1, 1]} : vector<8x96xf32> to vector<8x32xf32>
    %332 = vector.extract_strided_slice %330 {offsets = [0, 0], sizes = [8, 32], strides = [1, 1]} : vector<8x96xf32> to vector<8x32xf32>
    %333 = arith.addf %331, %332 : vector<8x32xf32>
    %334 = arith.negf %333 : vector<8x32xf32>
    %335 = math.exp %334 : vector<8x32xf32>
    %cst_46 = arith.constant 1.000000e+00 : f32
    %336 = vector.broadcast %cst_46 : f32 to vector<8x32xf32>
    %337 = arith.addf %336, %335 : vector<8x32xf32>
    %338 = arith.divf %336, %337 : vector<8x32xf32>
    %339 = vector.extract_strided_slice %329 {offsets = [0, 32], sizes = [8, 32], strides = [1, 1]} : vector<8x96xf32> to vector<8x32xf32>
    %340 = vector.extract_strided_slice %330 {offsets = [0, 32], sizes = [8, 32], strides = [1, 1]} : vector<8x96xf32> to vector<8x32xf32>
    %341 = arith.addf %339, %340 : vector<8x32xf32>
    %342 = arith.negf %341 : vector<8x32xf32>
    %343 = math.exp %342 : vector<8x32xf32>
    %cst_47 = arith.constant 1.000000e+00 : f32
    %344 = vector.broadcast %cst_47 : f32 to vector<8x32xf32>
    %345 = arith.addf %344, %343 : vector<8x32xf32>
    %346 = arith.divf %344, %345 : vector<8x32xf32>
    %347 = vector.extract_strided_slice %329 {offsets = [0, 64], sizes = [8, 32], strides = [1, 1]} : vector<8x96xf32> to vector<8x32xf32>
    %348 = vector.extract_strided_slice %330 {offsets = [0, 64], sizes = [8, 32], strides = [1, 1]} : vector<8x96xf32> to vector<8x32xf32>
    %349 = arith.mulf %338, %348 : vector<8x32xf32>
    %350 = arith.addf %347, %349 : vector<8x32xf32>
    %351 = math.tanh %350 : vector<8x32xf32>
    %cst_48 = arith.constant 1.000000e+00 : f32
    %352 = vector.broadcast %cst_48 : f32 to vector<8x32xf32>
    %353 = arith.subf %352, %346 : vector<8x32xf32>
    %354 = arith.mulf %353, %351 : vector<8x32xf32>
    %355 = arith.mulf %346, %295 : vector<8x32xf32>
    %356 = arith.addf %354, %355 : vector<8x32xf32>
    %357 = vector.extract_strided_slice %2 {offsets = [0, 4], sizes = [8, 1], strides = [1, 1]} : vector<8x8xf32> to vector<8x1xf32>
    %358 = vector.extract_strided_slice %2 {offsets = [0, 3], sizes = [8, 1], strides = [1, 1]} : vector<8x8xf32> to vector<8x1xf32>
    %359 = arith.subf %328, %291 : vector<8x32xf32>
    %360 = vector.broadcast %357 : vector<8x1xf32> to vector<8x32xf32>
    %361 = arith.mulf %360, %359 : vector<8x32xf32>
    %362 = arith.addf %291, %361 : vector<8x32xf32>
    %363 = arith.subf %356, %295 : vector<8x32xf32>
    %364 = vector.broadcast %358 : vector<8x1xf32> to vector<8x32xf32>
    %365 = arith.mulf %364, %363 : vector<8x32xf32>
    %366 = arith.addf %295, %365 : vector<8x32xf32>
    %367 = tpu.concatenate %362, %366 in 1 : vector<8x32xf32>, vector<8x32xf32> -> vector<8x64xf32>
    %368 = arith.truncf %367 : vector<8x64xf32> to vector<8x64xbf16>
    %cst_49 = arith.constant dense<0.000000e+00> : vector<8x192xf32>
    %369 = tpu.matmul %368, %8, %cst_49 {dimension_numbers = #tpu.dot_dimension_numbers<[1], [0], [0], [1], [0, 0, 1, 1], [], []>} : vector<8x64xbf16>, vector<64x192xbf16>, vector<8x192xf32> -> vector<8x192xf32>
    %370 = vector.broadcast %9 : vector<1x192xf32> to vector<8x192xf32>
    %371 = arith.addf %369, %370 : vector<8x192xf32>
    %372 = vector.extract_strided_slice %7 {offsets = [40, 0], sizes = [8, 96], strides = [1, 1]} : vector<64x192xf32> to vector<8x96xf32>
    %373 = vector.extract_strided_slice %371 {offsets = [0, 0], sizes = [8, 96], strides = [1, 1]} : vector<8x192xf32> to vector<8x96xf32>
    %374 = vector.extract_strided_slice %372 {offsets = [0, 0], sizes = [8, 32], strides = [1, 1]} : vector<8x96xf32> to vector<8x32xf32>
    %375 = vector.extract_strided_slice %373 {offsets = [0, 0], sizes = [8, 32], strides = [1, 1]} : vector<8x96xf32> to vector<8x32xf32>
    %376 = arith.addf %374, %375 : vector<8x32xf32>
    %377 = arith.negf %376 : vector<8x32xf32>
    %378 = math.exp %377 : vector<8x32xf32>
    %cst_50 = arith.constant 1.000000e+00 : f32
    %379 = vector.broadcast %cst_50 : f32 to vector<8x32xf32>
    %380 = arith.addf %379, %378 : vector<8x32xf32>
    %381 = arith.divf %379, %380 : vector<8x32xf32>
    %382 = vector.extract_strided_slice %372 {offsets = [0, 32], sizes = [8, 32], strides = [1, 1]} : vector<8x96xf32> to vector<8x32xf32>
    %383 = vector.extract_strided_slice %373 {offsets = [0, 32], sizes = [8, 32], strides = [1, 1]} : vector<8x96xf32> to vector<8x32xf32>
    %384 = arith.addf %382, %383 : vector<8x32xf32>
    %385 = arith.negf %384 : vector<8x32xf32>
    %386 = math.exp %385 : vector<8x32xf32>
    %cst_51 = arith.constant 1.000000e+00 : f32
    %387 = vector.broadcast %cst_51 : f32 to vector<8x32xf32>
    %388 = arith.addf %387, %386 : vector<8x32xf32>
    %389 = arith.divf %387, %388 : vector<8x32xf32>
    %390 = vector.extract_strided_slice %372 {offsets = [0, 64], sizes = [8, 32], strides = [1, 1]} : vector<8x96xf32> to vector<8x32xf32>
    %391 = vector.extract_strided_slice %373 {offsets = [0, 64], sizes = [8, 32], strides = [1, 1]} : vector<8x96xf32> to vector<8x32xf32>
    %392 = arith.mulf %381, %391 : vector<8x32xf32>
    %393 = arith.addf %390, %392 : vector<8x32xf32>
    %394 = math.tanh %393 : vector<8x32xf32>
    %cst_52 = arith.constant 1.000000e+00 : f32
    %395 = vector.broadcast %cst_52 : f32 to vector<8x32xf32>
    %396 = arith.subf %395, %389 : vector<8x32xf32>
    %397 = arith.mulf %396, %394 : vector<8x32xf32>
    %398 = arith.mulf %389, %362 : vector<8x32xf32>
    %399 = arith.addf %397, %398 : vector<8x32xf32>
    %400 = vector.extract_strided_slice %7 {offsets = [16, 96], sizes = [8, 96], strides = [1, 1]} : vector<64x192xf32> to vector<8x96xf32>
    %401 = vector.extract_strided_slice %371 {offsets = [0, 96], sizes = [8, 96], strides = [1, 1]} : vector<8x192xf32> to vector<8x96xf32>
    %402 = vector.extract_strided_slice %400 {offsets = [0, 0], sizes = [8, 32], strides = [1, 1]} : vector<8x96xf32> to vector<8x32xf32>
    %403 = vector.extract_strided_slice %401 {offsets = [0, 0], sizes = [8, 32], strides = [1, 1]} : vector<8x96xf32> to vector<8x32xf32>
    %404 = arith.addf %402, %403 : vector<8x32xf32>
    %405 = arith.negf %404 : vector<8x32xf32>
    %406 = math.exp %405 : vector<8x32xf32>
    %cst_53 = arith.constant 1.000000e+00 : f32
    %407 = vector.broadcast %cst_53 : f32 to vector<8x32xf32>
    %408 = arith.addf %407, %406 : vector<8x32xf32>
    %409 = arith.divf %407, %408 : vector<8x32xf32>
    %410 = vector.extract_strided_slice %400 {offsets = [0, 32], sizes = [8, 32], strides = [1, 1]} : vector<8x96xf32> to vector<8x32xf32>
    %411 = vector.extract_strided_slice %401 {offsets = [0, 32], sizes = [8, 32], strides = [1, 1]} : vector<8x96xf32> to vector<8x32xf32>
    %412 = arith.addf %410, %411 : vector<8x32xf32>
    %413 = arith.negf %412 : vector<8x32xf32>
    %414 = math.exp %413 : vector<8x32xf32>
    %cst_54 = arith.constant 1.000000e+00 : f32
    %415 = vector.broadcast %cst_54 : f32 to vector<8x32xf32>
    %416 = arith.addf %415, %414 : vector<8x32xf32>
    %417 = arith.divf %415, %416 : vector<8x32xf32>
    %418 = vector.extract_strided_slice %400 {offsets = [0, 64], sizes = [8, 32], strides = [1, 1]} : vector<8x96xf32> to vector<8x32xf32>
    %419 = vector.extract_strided_slice %401 {offsets = [0, 64], sizes = [8, 32], strides = [1, 1]} : vector<8x96xf32> to vector<8x32xf32>
    %420 = arith.mulf %409, %419 : vector<8x32xf32>
    %421 = arith.addf %418, %420 : vector<8x32xf32>
    %422 = math.tanh %421 : vector<8x32xf32>
    %cst_55 = arith.constant 1.000000e+00 : f32
    %423 = vector.broadcast %cst_55 : f32 to vector<8x32xf32>
    %424 = arith.subf %423, %417 : vector<8x32xf32>
    %425 = arith.mulf %424, %422 : vector<8x32xf32>
    %426 = arith.mulf %417, %366 : vector<8x32xf32>
    %427 = arith.addf %425, %426 : vector<8x32xf32>
    %428 = vector.extract_strided_slice %2 {offsets = [0, 5], sizes = [8, 1], strides = [1, 1]} : vector<8x8xf32> to vector<8x1xf32>
    %429 = vector.extract_strided_slice %2 {offsets = [0, 2], sizes = [8, 1], strides = [1, 1]} : vector<8x8xf32> to vector<8x1xf32>
    %430 = arith.subf %399, %362 : vector<8x32xf32>
    %431 = vector.broadcast %428 : vector<8x1xf32> to vector<8x32xf32>
    %432 = arith.mulf %431, %430 : vector<8x32xf32>
    %433 = arith.addf %362, %432 : vector<8x32xf32>
    %434 = arith.subf %427, %366 : vector<8x32xf32>
    %435 = vector.broadcast %429 : vector<8x1xf32> to vector<8x32xf32>
    %436 = arith.mulf %435, %434 : vector<8x32xf32>
    %437 = arith.addf %366, %436 : vector<8x32xf32>
    %438 = tpu.concatenate %433, %437 in 1 : vector<8x32xf32>, vector<8x32xf32> -> vector<8x64xf32>
    %439 = arith.truncf %438 : vector<8x64xf32> to vector<8x64xbf16>
    %cst_56 = arith.constant dense<0.000000e+00> : vector<8x192xf32>
    %440 = tpu.matmul %439, %8, %cst_56 {dimension_numbers = #tpu.dot_dimension_numbers<[1], [0], [0], [1], [0, 0, 1, 1], [], []>} : vector<8x64xbf16>, vector<64x192xbf16>, vector<8x192xf32> -> vector<8x192xf32>
    %441 = vector.broadcast %9 : vector<1x192xf32> to vector<8x192xf32>
    %442 = arith.addf %440, %441 : vector<8x192xf32>
    %443 = vector.extract_strided_slice %7 {offsets = [48, 0], sizes = [8, 96], strides = [1, 1]} : vector<64x192xf32> to vector<8x96xf32>
    %444 = vector.extract_strided_slice %442 {offsets = [0, 0], sizes = [8, 96], strides = [1, 1]} : vector<8x192xf32> to vector<8x96xf32>
    %445 = vector.extract_strided_slice %443 {offsets = [0, 0], sizes = [8, 32], strides = [1, 1]} : vector<8x96xf32> to vector<8x32xf32>
    %446 = vector.extract_strided_slice %444 {offsets = [0, 0], sizes = [8, 32], strides = [1, 1]} : vector<8x96xf32> to vector<8x32xf32>
    %447 = arith.addf %445, %446 : vector<8x32xf32>
    %448 = arith.negf %447 : vector<8x32xf32>
    %449 = math.exp %448 : vector<8x32xf32>
    %cst_57 = arith.constant 1.000000e+00 : f32
    %450 = vector.broadcast %cst_57 : f32 to vector<8x32xf32>
    %451 = arith.addf %450, %449 : vector<8x32xf32>
    %452 = arith.divf %450, %451 : vector<8x32xf32>
    %453 = vector.extract_strided_slice %443 {offsets = [0, 32], sizes = [8, 32], strides = [1, 1]} : vector<8x96xf32> to vector<8x32xf32>
    %454 = vector.extract_strided_slice %444 {offsets = [0, 32], sizes = [8, 32], strides = [1, 1]} : vector<8x96xf32> to vector<8x32xf32>
    %455 = arith.addf %453, %454 : vector<8x32xf32>
    %456 = arith.negf %455 : vector<8x32xf32>
    %457 = math.exp %456 : vector<8x32xf32>
    %cst_58 = arith.constant 1.000000e+00 : f32
    %458 = vector.broadcast %cst_58 : f32 to vector<8x32xf32>
    %459 = arith.addf %458, %457 : vector<8x32xf32>
    %460 = arith.divf %458, %459 : vector<8x32xf32>
    %461 = vector.extract_strided_slice %443 {offsets = [0, 64], sizes = [8, 32], strides = [1, 1]} : vector<8x96xf32> to vector<8x32xf32>
    %462 = vector.extract_strided_slice %444 {offsets = [0, 64], sizes = [8, 32], strides = [1, 1]} : vector<8x96xf32> to vector<8x32xf32>
    %463 = arith.mulf %452, %462 : vector<8x32xf32>
    %464 = arith.addf %461, %463 : vector<8x32xf32>
    %465 = math.tanh %464 : vector<8x32xf32>
    %cst_59 = arith.constant 1.000000e+00 : f32
    %466 = vector.broadcast %cst_59 : f32 to vector<8x32xf32>
    %467 = arith.subf %466, %460 : vector<8x32xf32>
    %468 = arith.mulf %467, %465 : vector<8x32xf32>
    %469 = arith.mulf %460, %433 : vector<8x32xf32>
    %470 = arith.addf %468, %469 : vector<8x32xf32>
    %471 = vector.extract_strided_slice %7 {offsets = [8, 96], sizes = [8, 96], strides = [1, 1]} : vector<64x192xf32> to vector<8x96xf32>
    %472 = vector.extract_strided_slice %442 {offsets = [0, 96], sizes = [8, 96], strides = [1, 1]} : vector<8x192xf32> to vector<8x96xf32>
    %473 = vector.extract_strided_slice %471 {offsets = [0, 0], sizes = [8, 32], strides = [1, 1]} : vector<8x96xf32> to vector<8x32xf32>
    %474 = vector.extract_strided_slice %472 {offsets = [0, 0], sizes = [8, 32], strides = [1, 1]} : vector<8x96xf32> to vector<8x32xf32>
    %475 = arith.addf %473, %474 : vector<8x32xf32>
    %476 = arith.negf %475 : vector<8x32xf32>
    %477 = math.exp %476 : vector<8x32xf32>
    %cst_60 = arith.constant 1.000000e+00 : f32
    %478 = vector.broadcast %cst_60 : f32 to vector<8x32xf32>
    %479 = arith.addf %478, %477 : vector<8x32xf32>
    %480 = arith.divf %478, %479 : vector<8x32xf32>
    %481 = vector.extract_strided_slice %471 {offsets = [0, 32], sizes = [8, 32], strides = [1, 1]} : vector<8x96xf32> to vector<8x32xf32>
    %482 = vector.extract_strided_slice %472 {offsets = [0, 32], sizes = [8, 32], strides = [1, 1]} : vector<8x96xf32> to vector<8x32xf32>
    %483 = arith.addf %481, %482 : vector<8x32xf32>
    %484 = arith.negf %483 : vector<8x32xf32>
    %485 = math.exp %484 : vector<8x32xf32>
    %cst_61 = arith.constant 1.000000e+00 : f32
    %486 = vector.broadcast %cst_61 : f32 to vector<8x32xf32>
    %487 = arith.addf %486, %485 : vector<8x32xf32>
    %488 = arith.divf %486, %487 : vector<8x32xf32>
    %489 = vector.extract_strided_slice %471 {offsets = [0, 64], sizes = [8, 32], strides = [1, 1]} : vector<8x96xf32> to vector<8x32xf32>
    %490 = vector.extract_strided_slice %472 {offsets = [0, 64], sizes = [8, 32], strides = [1, 1]} : vector<8x96xf32> to vector<8x32xf32>
    %491 = arith.mulf %480, %490 : vector<8x32xf32>
    %492 = arith.addf %489, %491 : vector<8x32xf32>
    %493 = math.tanh %492 : vector<8x32xf32>
    %cst_62 = arith.constant 1.000000e+00 : f32
    %494 = vector.broadcast %cst_62 : f32 to vector<8x32xf32>
    %495 = arith.subf %494, %488 : vector<8x32xf32>
    %496 = arith.mulf %495, %493 : vector<8x32xf32>
    %497 = arith.mulf %488, %437 : vector<8x32xf32>
    %498 = arith.addf %496, %497 : vector<8x32xf32>
    %499 = vector.extract_strided_slice %2 {offsets = [0, 6], sizes = [8, 1], strides = [1, 1]} : vector<8x8xf32> to vector<8x1xf32>
    %500 = vector.extract_strided_slice %2 {offsets = [0, 1], sizes = [8, 1], strides = [1, 1]} : vector<8x8xf32> to vector<8x1xf32>
    %501 = arith.subf %470, %433 : vector<8x32xf32>
    %502 = vector.broadcast %499 : vector<8x1xf32> to vector<8x32xf32>
    %503 = arith.mulf %502, %501 : vector<8x32xf32>
    %504 = arith.addf %433, %503 : vector<8x32xf32>
    %505 = arith.subf %498, %437 : vector<8x32xf32>
    %506 = vector.broadcast %500 : vector<8x1xf32> to vector<8x32xf32>
    %507 = arith.mulf %506, %505 : vector<8x32xf32>
    %508 = arith.addf %437, %507 : vector<8x32xf32>
    %509 = tpu.concatenate %504, %508 in 1 : vector<8x32xf32>, vector<8x32xf32> -> vector<8x64xf32>
    %510 = arith.truncf %509 : vector<8x64xf32> to vector<8x64xbf16>
    %cst_63 = arith.constant dense<0.000000e+00> : vector<8x192xf32>
    %511 = tpu.matmul %510, %8, %cst_63 {dimension_numbers = #tpu.dot_dimension_numbers<[1], [0], [0], [1], [0, 0, 1, 1], [], []>} : vector<8x64xbf16>, vector<64x192xbf16>, vector<8x192xf32> -> vector<8x192xf32>
    %512 = vector.broadcast %9 : vector<1x192xf32> to vector<8x192xf32>
    %513 = arith.addf %511, %512 : vector<8x192xf32>
    %514 = vector.extract_strided_slice %7 {offsets = [56, 0], sizes = [8, 96], strides = [1, 1]} : vector<64x192xf32> to vector<8x96xf32>
    %515 = vector.extract_strided_slice %513 {offsets = [0, 0], sizes = [8, 96], strides = [1, 1]} : vector<8x192xf32> to vector<8x96xf32>
    %516 = vector.extract_strided_slice %514 {offsets = [0, 0], sizes = [8, 32], strides = [1, 1]} : vector<8x96xf32> to vector<8x32xf32>
    %517 = vector.extract_strided_slice %515 {offsets = [0, 0], sizes = [8, 32], strides = [1, 1]} : vector<8x96xf32> to vector<8x32xf32>
    %518 = arith.addf %516, %517 : vector<8x32xf32>
    %519 = arith.negf %518 : vector<8x32xf32>
    %520 = math.exp %519 : vector<8x32xf32>
    %cst_64 = arith.constant 1.000000e+00 : f32
    %521 = vector.broadcast %cst_64 : f32 to vector<8x32xf32>
    %522 = arith.addf %521, %520 : vector<8x32xf32>
    %523 = arith.divf %521, %522 : vector<8x32xf32>
    %524 = vector.extract_strided_slice %514 {offsets = [0, 32], sizes = [8, 32], strides = [1, 1]} : vector<8x96xf32> to vector<8x32xf32>
    %525 = vector.extract_strided_slice %515 {offsets = [0, 32], sizes = [8, 32], strides = [1, 1]} : vector<8x96xf32> to vector<8x32xf32>
    %526 = arith.addf %524, %525 : vector<8x32xf32>
    %527 = arith.negf %526 : vector<8x32xf32>
    %528 = math.exp %527 : vector<8x32xf32>
    %cst_65 = arith.constant 1.000000e+00 : f32
    %529 = vector.broadcast %cst_65 : f32 to vector<8x32xf32>
    %530 = arith.addf %529, %528 : vector<8x32xf32>
    %531 = arith.divf %529, %530 : vector<8x32xf32>
    %532 = vector.extract_strided_slice %514 {offsets = [0, 64], sizes = [8, 32], strides = [1, 1]} : vector<8x96xf32> to vector<8x32xf32>
    %533 = vector.extract_strided_slice %515 {offsets = [0, 64], sizes = [8, 32], strides = [1, 1]} : vector<8x96xf32> to vector<8x32xf32>
    %534 = arith.mulf %523, %533 : vector<8x32xf32>
    %535 = arith.addf %532, %534 : vector<8x32xf32>
    %536 = math.tanh %535 : vector<8x32xf32>
    %cst_66 = arith.constant 1.000000e+00 : f32
    %537 = vector.broadcast %cst_66 : f32 to vector<8x32xf32>
    %538 = arith.subf %537, %531 : vector<8x32xf32>
    %539 = arith.mulf %538, %536 : vector<8x32xf32>
    %540 = arith.mulf %531, %504 : vector<8x32xf32>
    %541 = arith.addf %539, %540 : vector<8x32xf32>
    %542 = vector.extract_strided_slice %7 {offsets = [0, 96], sizes = [8, 96], strides = [1, 1]} : vector<64x192xf32> to vector<8x96xf32>
    %543 = vector.extract_strided_slice %513 {offsets = [0, 96], sizes = [8, 96], strides = [1, 1]} : vector<8x192xf32> to vector<8x96xf32>
    %544 = vector.extract_strided_slice %542 {offsets = [0, 0], sizes = [8, 32], strides = [1, 1]} : vector<8x96xf32> to vector<8x32xf32>
    %545 = vector.extract_strided_slice %543 {offsets = [0, 0], sizes = [8, 32], strides = [1, 1]} : vector<8x96xf32> to vector<8x32xf32>
    %546 = arith.addf %544, %545 : vector<8x32xf32>
    %547 = arith.negf %546 : vector<8x32xf32>
    %548 = math.exp %547 : vector<8x32xf32>
    %cst_67 = arith.constant 1.000000e+00 : f32
    %549 = vector.broadcast %cst_67 : f32 to vector<8x32xf32>
    %550 = arith.addf %549, %548 : vector<8x32xf32>
    %551 = arith.divf %549, %550 : vector<8x32xf32>
    %552 = vector.extract_strided_slice %542 {offsets = [0, 32], sizes = [8, 32], strides = [1, 1]} : vector<8x96xf32> to vector<8x32xf32>
    %553 = vector.extract_strided_slice %543 {offsets = [0, 32], sizes = [8, 32], strides = [1, 1]} : vector<8x96xf32> to vector<8x32xf32>
    %554 = arith.addf %552, %553 : vector<8x32xf32>
    %555 = arith.negf %554 : vector<8x32xf32>
    %556 = math.exp %555 : vector<8x32xf32>
    %cst_68 = arith.constant 1.000000e+00 : f32
    %557 = vector.broadcast %cst_68 : f32 to vector<8x32xf32>
    %558 = arith.addf %557, %556 : vector<8x32xf32>
    %559 = arith.divf %557, %558 : vector<8x32xf32>
    %560 = vector.extract_strided_slice %542 {offsets = [0, 64], sizes = [8, 32], strides = [1, 1]} : vector<8x96xf32> to vector<8x32xf32>
    %561 = vector.extract_strided_slice %543 {offsets = [0, 64], sizes = [8, 32], strides = [1, 1]} : vector<8x96xf32> to vector<8x32xf32>
    %562 = arith.mulf %551, %561 : vector<8x32xf32>
    %563 = arith.addf %560, %562 : vector<8x32xf32>
    %564 = math.tanh %563 : vector<8x32xf32>
    %cst_69 = arith.constant 1.000000e+00 : f32
    %565 = vector.broadcast %cst_69 : f32 to vector<8x32xf32>
    %566 = arith.subf %565, %559 : vector<8x32xf32>
    %567 = arith.mulf %566, %564 : vector<8x32xf32>
    %568 = arith.mulf %559, %508 : vector<8x32xf32>
    %569 = arith.addf %567, %568 : vector<8x32xf32>
    %570 = vector.extract_strided_slice %2 {offsets = [0, 7], sizes = [8, 1], strides = [1, 1]} : vector<8x8xf32> to vector<8x1xf32>
    %571 = vector.extract_strided_slice %2 {offsets = [0, 0], sizes = [8, 1], strides = [1, 1]} : vector<8x8xf32> to vector<8x1xf32>
    %572 = arith.subf %541, %504 : vector<8x32xf32>
    %573 = vector.broadcast %570 : vector<8x1xf32> to vector<8x32xf32>
    %574 = arith.mulf %573, %572 : vector<8x32xf32>
    %575 = arith.addf %504, %574 : vector<8x32xf32>
    %576 = arith.subf %569, %508 : vector<8x32xf32>
    %577 = vector.broadcast %571 : vector<8x1xf32> to vector<8x32xf32>
    %578 = arith.mulf %577, %576 : vector<8x32xf32>
    %579 = arith.addf %508, %578 : vector<8x32xf32>
    %c0_70 = arith.constant 0 : index
    %c0_71 = arith.constant 0 : index
    %580 = vector.load %arg7[%c0_70, %c0_71] : memref<32x64xf32, #tpu.memory_space<vmem>>, vector<32x64xf32>
    %cst_72 = arith.constant dense<0.000000e+00> : vector<8x64xf32>
    %581 = tpu.matmul %579, %580, %cst_72 {dimension_numbers = #tpu.dot_dimension_numbers<[1], [0], [0], [1], [0, 0, 1, 1], [], []>} : vector<8x32xf32>, vector<32x64xf32>, vector<8x64xf32> -> vector<8x64xf32>
    %c0_73 = arith.constant 0 : index
    %c0_74 = arith.constant 0 : index
    %582 = vector.load %arg8[%c0_73, %c0_74] : memref<1x64xf32, #tpu.memory_space<vmem>>, vector<1x64xf32>
    %583 = vector.broadcast %582 : vector<1x64xf32> to vector<8x64xf32>
    %584 = arith.addf %581, %583 : vector<8x64xf32>
    %585 = tpu.concatenate %575, %579, %584 in 1 : vector<8x32xf32>, vector<8x32xf32>, vector<8x64xf32> -> vector<8x128xf32>
    %c0_75 = arith.constant 0 : index
    %c0_76 = arith.constant 0 : index
    %586 = vector.load %arg9[%c0_75, %c0_76] : memref<8x128xf32, #tpu.memory_space<vmem>>, vector<8x128xf32>
    tpu.vector_store %arg9[%c0_75, %c0_76], %585 {strides = array<i32>} : memref<8x128xf32, #tpu.memory_space<vmem>>, vector<8x128xf32>,
    return
  }
  func.func @transform_0(%arg0: i32) -> (i32, i32) {
    %c0_i32 = arith.constant 0 : i32
    %c0_i32_0 = arith.constant 0 : i32
    return %arg0, %c0_i32 : i32, i32
  }
  func.func @transform_1(%arg0: i32) -> (i32, i32, i32) {
    %c0_i32 = arith.constant 0 : i32
    %c0_i32_0 = arith.constant 0 : i32
    %c0_i32_1 = arith.constant 0 : i32
    return %arg0, %c0_i32, %c0_i32_0 : i32, i32, i32
  }
  func.func @transform_2(%arg0: i32) -> (i32, i32) {
    %c0_i32 = arith.constant 0 : i32
    %c0_i32_0 = arith.constant 0 : i32
    %c0_i32_1 = arith.constant 0 : i32
    return %c0_i32, %c0_i32_0 : i32, i32
  }
  func.func @transform_3(%arg0: i32) -> (i32, i32) {
    %c0_i32 = arith.constant 0 : i32
    %c0_i32_0 = arith.constant 0 : i32
    %c0_i32_1 = arith.constant 0 : i32
    return %c0_i32, %c0_i32_0 : i32, i32
  }
  func.func @transform_4(%arg0: i32) -> (i32, i32) {
    %c0_i32 = arith.constant 0 : i32
    %c0_i32_0 = arith.constant 0 : i32
    %c0_i32_1 = arith.constant 0 : i32
    return %c0_i32, %c0_i32_0 : i32, i32
  }
  func.func @transform_5(%arg0: i32) -> (i32, i32) {
    %c0_i32 = arith.constant 0 : i32
    %c0_i32_0 = arith.constant 0 : i32
    %c0_i32_1 = arith.constant 0 : i32
    return %c0_i32, %c0_i32_0 : i32, i32
  }
  func.func @transform_6(%arg0: i32) -> (i32, i32) {
    %c0_i32 = arith.constant 0 : i32
    %c0_i32_0 = arith.constant 0 : i32
    %c0_i32_1 = arith.constant 0 : i32
    return %c0_i32, %c0_i32_0 : i32, i32
  }
  func.func @transform_7(%arg0: i32) -> (i32, i32) {
    %c0_i32 = arith.constant 0 : i32
    %c0_i32_0 = arith.constant 0 : i32
    %c0_i32_1 = arith.constant 0 : i32
    return %c0_i32, %c0_i32_0 : i32, i32
  }
  func.func @transform_8(%arg0: i32) -> (i32, i32) {
    %c0_i32 = arith.constant 0 : i32
    %c0_i32_0 = arith.constant 0 : i32
    return %arg0, %c0_i32 : i32, i32
  }
}

</mosaic_0001>

<llo_original>
// kernel: tpu_custom_call.1
$region0: #{tpu_custom_call.1}
  #allocation0 [shape = 'u32[]', space=smem, size = 0x4, offset = 0x4, fixed_abs, tag = 'smem constant byte address 0x4 - core index']
  #allocation1 [shape = 'u32[144,128]{1,0:T(1,128)}', space=vmem, size = 0x12000, scoped, tag = 'internal scratch']
  %s0 = inlined_call_operand.vmem [shape: f32[8,8], index: 0, kind: input, shape index: {}]
  %s1 = inlined_call_operand.vmem [shape: bf16[1,64,32], index: 1, kind: input, shape index: {}]
  %s2 = inlined_call_operand.vmem [shape: bf16[32,192], index: 2, kind: input, shape index: {}]
  %s3 = inlined_call_operand.vmem [shape: f32[1,192], index: 3, kind: input, shape index: {}]
  %s4 = inlined_call_operand.hbm [shape: bf16[64,192], index: 4, kind: input, shape index: {}]
  %s5 = inlined_call_operand.vmem [shape: f32[1,192], index: 5, kind: input, shape index: {}]
  %s6 = inlined_call_operand.hbm [shape: f32[32,64], index: 6, kind: input, shape index: {}]
  %s7 = inlined_call_operand.vmem [shape: f32[1,64], index: 7, kind: input, shape index: {}]
  %s8 = inlined_call_operand.hbm [shape: f32[8,128], index: 8, kind: output, shape index: {}]
  %s9 = sld [smem:[#allocation0]]
  $region50: #{tpu_custom_call.1} parent=0
    _
  %s11 = ssub.s32 1, %s9
  %s12 = scalar_select 0, %s11, %s9
  $region1: #{tpu_custom_call.1} parent=0
    #allocation2 [shape = 'u8[32768]{0}', space=vmem, size = 0x8000, scoped, tag = 'input window, operand 4, single buffered']
    #allocation3 [shape = 's32[1]{0}', space=sflag, size = 0x4, scoped, tag = 'scoped memory for tpu_custom_call.1']
    #allocation4 [shape = 's32[1]{0}', space=sflag, size = 0x4, scoped, tag = 'scoped memory for tpu_custom_call.1']
    #allocation5 [shape = 'u8[16384]{0}', space=vmem, size = 0x4000, scoped, tag = 'input window, operand 6, single buffered']
    #allocation6 [shape = 's32[1]{0}', space=sflag, size = 0x4, scoped, tag = 'scoped memory for tpu_custom_call.1']
    #allocation7 [shape = 'u8[4096]{0}', space=vmem, size = 0x1000, scoped, tag = 'output window, operand 0, single buffered']
    %13 = vsyncpa [#allocation3], 0
    %14 = vsyncpa [#allocation6], 0
    %15 = vsyncpa [#allocation4], 0
    // Predicated region
    $region2: #{tpu_custom_call.1} parent=1 // pred_check
      _
    $region3: #{tpu_custom_call.1} parent=1 // pred_check_branch
      %17 = sbr.rel (0) target = $region5
    $region4: #{tpu_custom_call.1} parent=1 // pred_region
      _
    $region5: #{tpu_custom_call.1} parent=1 // pred_fallthru
      _
    // Predicated region
    $region6: #{tpu_custom_call.1} parent=1 // pred_check
      _
    $region7: #{tpu_custom_call.1} parent=1 // pred_check_branch
      %19 = sbr.rel (0) target = $region9
    $region8: #{tpu_custom_call.1} parent=1 // pred_region
      _
    $region9: #{tpu_custom_call.1} parent=1 // pred_fallthru
      _
    // Predicated region
    $region10: #{tpu_custom_call.1} parent=1 // pred_check
      _
    $region11: #{tpu_custom_call.1} parent=1 // pred_check_branch
      %21 = sbr.rel (0) target = $region13
    $region12: #{tpu_custom_call.1} parent=1 // pred_region
      _
    $region13: #{tpu_custom_call.1} parent=1 // pred_fallthru
      _
    // Predicated region
    $region14: #{tpu_custom_call.1} parent=1 // pred_check
      _
    $region15: #{tpu_custom_call.1} parent=1 // pred_check_branch
      %23 = sbr.rel (0) target = $region17
    $region16: #{tpu_custom_call.1} parent=1 // pred_region
      _
    $region17: #{tpu_custom_call.1} parent=1 // pred_fallthru
      _
    // Predicated region
    $region18: #{tpu_custom_call.1} parent=1 // pred_check
      _
    $region19: #{tpu_custom_call.1} parent=1 // pred_check_branch
      %25 = sbr.rel (0) target = $region21
    $region20: #{tpu_custom_call.1} parent=1 // pred_region
      %s27 = ssub.s32 1024, 1024
      %28 = vsyncadd [#allocation3], %s27
      %s29 = sshll.u32 [#allocation2], 4
      %s30 = int_to_ptr.vmem [resolvable:$true] %s29
      %35 = dma.hbm_to_vmem [thread:$0]  %s4, 1024, %s30, [#allocation3], 128, 128, 8
    $region21: #{tpu_custom_call.1} parent=1 // pred_fallthru
      _
    // Predicated region
    $region22: #{tpu_custom_call.1} parent=1 // pred_check
      _
    $region23: #{tpu_custom_call.1} parent=1 // pred_check_branch
      %37 = sbr.rel (0) target = $region25
    $region24: #{tpu_custom_call.1} parent=1 // pred_region
      _
    $region25: #{tpu_custom_call.1} parent=1 // pred_fallthru
      _
    // Predicated region
    $region26: #{tpu_custom_call.1} parent=1 // pred_check
      _
    $region27: #{tpu_custom_call.1} parent=1 // pred_check_branch
      %39 = sbr.rel (0) target = $region29
    $region28: #{tpu_custom_call.1} parent=1 // pred_region
      %s41 = ssub.s32 512, 512
      %42 = vsyncadd [#allocation6], %s41
      %s43 = sshll.u32 [#allocation5], 4
      %s44 = int_to_ptr.vmem [resolvable:$true] %s43
      %49 = dma.hbm_to_vmem [thread:$0]  %s6, 512, %s44, [#allocation6], 128, 128, 8
    $region29: #{tpu_custom_call.1} parent=1 // pred_fallthru
      _
    // Predicated region
    $region30: #{tpu_custom_call.1} parent=1 // pred_check
      _
    $region31: #{tpu_custom_call.1} parent=1 // pred_check_branch
      %51 = sbr.rel (0) target = $region33
    $region32: #{tpu_custom_call.1} parent=1 // pred_region
      _
    $region33: #{tpu_custom_call.1} parent=1 // pred_fallthru
      _
    // Predicated region
    $region34: #{tpu_custom_call.1} parent=1 // pred_check
      _
    $region35: #{tpu_custom_call.1} parent=1 // pred_check_branch
      %53 = sbr.rel (0) target = $region37
    $region36: #{tpu_custom_call.1} parent=1 // pred_region
      %54 = dma.done [#allocation3], 1024
    $region37: #{tpu_custom_call.1} parent=1 // pred_fallthru
      _
    // Predicated region
    $region38: #{tpu_custom_call.1} parent=1 // pred_check
      _
    $region39: #{tpu_custom_call.1} parent=1 // pred_check_branch
      %56 = sbr.rel (0) target = $region41
    $region40: #{tpu_custom_call.1} parent=1 // pred_region
      %57 = dma.done [#allocation6], 512
    $region41: #{tpu_custom_call.1} parent=1 // pred_fallthru
      _
    %v59 = vld [vmem:[%s1] sm:$0xf]
    %v60 = vld [vmem:[%s1 + $0x4] sm:$0xf]
    %v61 = vld [vmem:[%s1 + $0x8] sm:$0xf]
    %v62 = vld [vmem:[%s1 + $0xc] sm:$0xf]
    %v63 = vld [vmem:[%s1 + $0x10] sm:$0xf]
    %v64 = vld [vmem:[%s1 + $0x14] sm:$0xf]
    %v65 = vld [vmem:[%s1 + $0x18] sm:$0xf]
    %v66 = vld [vmem:[%s1 + $0x1c] sm:$0xf]
    %v67 = vld [vmem:[%s0] sm:$0xff]
    %v68 = vld [vmem:[%s2] sm:$0xff]
    %v69 = vld [vmem:[%s2 + $0x8] sm:$0xff]
    %v70 = vld [vmem:[%s2 + $0x10] sm:$0xff]
    %v71 = vld [vmem:[%s2 + $0x18] sm:$0xff]
    %v72 = vld [vmem:[%s3] sm:$0x3]
    %v74 = vlaneseq
    %v75 = vshrl.u32 %v74, 7
    %v76 = vsub.s32 0, %v75
    %v77 = vrot.slane %v72, %v76
    %v78 = vlaneseq
    %v79 = vshrl.u32 %v78, 7
    %v80 = vsub.s32 1, %v79
    %v81 = vrot.slane %v72, %v80
    %v92 = vunpack.c.l.b16 %v59
    %v93 = vunpack.c.l.b16 %v60
    %v94 = vunpack.c.l.b16 %v61
    %v95 = vunpack.c.l.b16 %v62
    %v96 = vunpack.c.l.b16 %v63
    %v97 = vunpack.c.l.b16 %v64
    %v98 = vunpack.c.l.b16 %v65
    %v99 = vunpack.c.l.b16 %v66
    %v100 = vpack.c.b16 %v93, %v92
    %v101 = vpack.c.b16 %v95, %v94
    %v102 = vpack.c.b16 %v97, %v96
    %v103 = vpack.c.b16 %v99, %v98
    %v108 = vunpack.c.l.b16 %v68
    %v109 = vunpack.c.h.b16 %v68
    %v110 = vunpack.c.l.b16 %v69
    %v111 = vunpack.c.h.b16 %v69
    %v112 = vunpack.c.l.b16 %v70
    %v113 = vunpack.c.h.b16 %v70
    %v114 = vunpack.c.l.b16 %v71
    %v115 = vunpack.c.h.b16 %v71
    %v116 = vpack.c.b16 %v110, %v108
    %v117 = vpack.c.b16 %v111, %v109
    %v118 = vpack.c.b16 %v114, %v112
    %v119 = vpack.c.b16 %v115, %v113
    %vm124 = vcmask 261120
    %v126 = vsel %vm124, %v100, 0
    %v129 = vsel %vm124, %v101, 0
    %v132 = vsel %vm124, %v102, 0
    %v135 = vsel %vm124, %v103, 0
    %137 = vmatprep.subr.bf16.mxu0 0
    %138 = vmatpush1.bf16.msra.mxu0 0
    %139 = vmatprep.subr.bf16.mxu0 0
    %140 = vmatpush1.bf16.msra.mxu0 0
    %141 = vmatprep.subr.bf16.mxu0 0
    %142 = vmatpush1.bf16.msra.mxu0 0
    %143 = vmatprep.subr.bf16.mxu0 0
    %144 = vmatpush1.bf16.msra.mxu0 0
    %145 = vmatprep.subr.bf16.mxu0 0
    %146 = vmatpush1.bf16.msra.mxu0 0
    %147 = vmatprep.subr.bf16.mxu0 0
    %148 = vmatpush1.bf16.msra.mxu0 0
    %149 = vmatprep.subr.bf16.mxu0 %v119
    %150 = vmatpush1.bf16.msra.mxu0 %v118
    %151 = vmatprep.subr.bf16.mxu0 %v117
    %152 = vmatpush1.bf16.msra.mxu0 %v116
    %153 = vmatprep.subr.bf16.mxu0 0
    %154 = vmatpush2.bf16.msra.mxu0 0
    %155 = vmatprep.subr.bf16.mxu0 0
    %156 = vmatpush2.bf16.msra.mxu0 0
    %157 = vmatprep.subr.bf16.mxu0 0
    %158 = vmatpush2.bf16.msra.mxu0 0
    %159 = vmatprep.subr.bf16.mxu0 0
    %160 = vmatpush2.bf16.msra.mxu0 0
    %161 = vmatprep.subr.bf16.mxu0 0
    %162 = vmatpush2.bf16.msra.mxu0 0
    %163 = vmatprep.subr.bf16.mxu0 0
    %164 = vmatpush2.bf16.msra.mxu0 0
    %165 = vmatprep.subr.bf16.mxu0 0
    %166 = vmatpush2.bf16.msra.mxu0 0
    %167 = vmatprep.subr.bf16.mxu0 0
    %168 = vmatpush2.bf16.msra.mxu0 0
    %169 = vmatprep.mubr.bf16.mxu0 0
    %170 = vmatmul.mubr.bf16.gmra.mxu0 %v126
    %v171 = vpop.f32.mrf.mxu0
    %v172 = vadd.f32 %v77, %v171
    %v173 = vpop.f32.mrf.mxu0
    %v174 = vadd.f32 %v81, %v173
    %v175 = vpop.f32.mrf.mxu0
    %v176 = vadd.f32 %v77, %v175
    %v177 = vpop.f32.mrf.mxu0
    %v178 = vadd.f32 %v81, %v177
    %179 = vmatprep.mubr.bf16.mxu0 0
    %180 = vmatmul.mubr.bf16.gmra.mxu0 %v129
    %v181 = vpop.f32.mrf.mxu0
    %v182 = vadd.f32 %v77, %v181
    %v183 = vpop.f32.mrf.mxu0
    %v184 = vadd.f32 %v81, %v183
    %v185 = vpop.f32.mrf.mxu0
    %v186 = vadd.f32 %v77, %v185
    %v187 = vpop.f32.mrf.mxu0
    %v188 = vadd.f32 %v81, %v187
    %189 = vmatprep.mubr.bf16.mxu0 0
    %190 = vmatmul.mubr.bf16.gmra.mxu0 %v132
    %v191 = vpop.f32.mrf.mxu0
    %v192 = vadd.f32 %v77, %v191
    %v193 = vpop.f32.mrf.mxu0
    %v194 = vadd.f32 %v81, %v193
    %v195 = vpop.f32.mrf.mxu0
    %v196 = vadd.f32 %v77, %v195
    %v197 = vpop.f32.mrf.mxu0
    %v198 = vadd.f32 %v81, %v197
    %199 = vmatprep.mubr.bf16.mxu0 0
    %200 = vmatmul.mubr.bf16.gmra.mxu0 %v135
    %v201 = vpop.f32.mrf.mxu0
    %v202 = vadd.f32 %v77, %v201
    %v203 = vpop.f32.mrf.mxu0
    %v204 = vadd.f32 %v81, %v203
    %v205 = vpop.f32.mrf.mxu0
    %v206 = vadd.f32 %v77, %v205
    %v207 = vpop.f32.mrf.mxu0
    %v208 = vadd.f32 %v81, %v207
    %209 = vdwg.mxu0
    %v210 = vld [vmem:[#allocation2] sm:$0xff]
    %v211 = vld [vmem:[#allocation2 + $0x8] sm:$0xff]
    %v212 = vld [vmem:[#allocation2 + $0x10] sm:$0xff]
    %v213 = vld [vmem:[#allocation2 + $0x18] sm:$0xff]
    %v214 = vld [vmem:[#allocation2 + $0x20] sm:$0xff]
    %v215 = vld [vmem:[#allocation2 + $0x28] sm:$0xff]
    %v216 = vld [vmem:[#allocation2 + $0x30] sm:$0xff]
    %v217 = vld [vmem:[#allocation2 + $0x38] sm:$0xff]
    %v218 = vld [vmem:[%s5] sm:$0x3]
    %v219 = vpack.c.bf16 0.0, 0.0
    %v221 = vlaneseq
    %v222 = vshrl.u32 %v221, 7
    %v223 = vsub.s32 0, %v222
    %v224 = vrot.slane %v218, %v223
    %v225 = vlaneseq
    %v226 = vshrl.u32 %v225, 7
    %v227 = vsub.s32 1, %v226
    %v228 = vrot.slane %v218, %v227
    %v239 = vunpack.c.l.b16 %v210
    %v240 = vunpack.c.h.b16 %v210
    %v241 = vunpack.c.l.b16 %v211
    %v242 = vunpack.c.h.b16 %v211
    %v243 = vunpack.c.l.b16 %v212
    %v244 = vunpack.c.h.b16 %v212
    %v245 = vunpack.c.l.b16 %v213
    %v246 = vunpack.c.h.b16 %v213
    %v247 = vunpack.c.l.b16 %v214
    %v248 = vunpack.c.h.b16 %v214
    %v249 = vunpack.c.l.b16 %v215
    %v250 = vunpack.c.h.b16 %v215
    %v251 = vunpack.c.l.b16 %v216
    %v252 = vunpack.c.h.b16 %v216
    %v253 = vunpack.c.l.b16 %v217
    %v254 = vunpack.c.h.b16 %v217
    %v255 = vpack.c.b16 %v241, %v239
    %v256 = vpack.c.b16 %v242, %v240
    %v257 = vpack.c.b16 %v245, %v243
    %v258 = vpack.c.b16 %v246, %v244
    %v259 = vpack.c.b16 %v249, %v247
    %v260 = vpack.c.b16 %v250, %v248
    %v261 = vpack.c.b16 %v253, %v251
    %v262 = vpack.c.b16 %v254, %v252
    %vm271 = vcmask 523264
    %v273 = vsel %vm271, %v219, 0
    %275 = vmatprep.subr.bf16.mxu0 0
    %276 = vmatpush1.bf16.msra.mxu0 0
    %277 = vmatprep.subr.bf16.mxu0 0
    %278 = vmatpush1.bf16.msra.mxu0 0
    %279 = vmatprep.subr.bf16.mxu0 0
    %280 = vmatpush1.bf16.msra.mxu0 0
    %281 = vmatprep.subr.bf16.mxu0 0
    %282 = vmatpush1.bf16.msra.mxu0 0
    %283 = vmatprep.subr.bf16.mxu0 %v262
    %284 = vmatpush1.bf16.msra.mxu0 %v261
    %285 = vmatprep.subr.bf16.mxu0 %v260
    %286 = vmatpush1.bf16.msra.mxu0 %v259
    %287 = vmatprep.subr.bf16.mxu0 %v258
    %288 = vmatpush1.bf16.msra.mxu0 %v257
    %289 = vmatprep.subr.bf16.mxu0 %v256
    %290 = vmatpush1.bf16.msra.mxu0 %v255
    %291 = vmatprep.subr.bf16.mxu0 0
    %292 = vmatpush2.bf16.msra.mxu0 0
    %293 = vmatprep.subr.bf16.mxu0 0
    %294 = vmatpush2.bf16.msra.mxu0 0
    %295 = vmatprep.subr.bf16.mxu0 0
    %296 = vmatpush2.bf16.msra.mxu0 0
    %297 = vmatprep.subr.bf16.mxu0 0
    %298 = vmatpush2.bf16.msra.mxu0 0
    %299 = vmatprep.subr.bf16.mxu0 0
    %300 = vmatpush2.bf16.msra.mxu0 0
    %301 = vmatprep.subr.bf16.mxu0 0
    %302 = vmatpush2.bf16.msra.mxu0 0
    %303 = vmatprep.subr.bf16.mxu0 0
    %304 = vmatpush2.bf16.msra.mxu0 0
    %305 = vmatprep.subr.bf16.mxu0 0
    %306 = vmatpush2.bf16.msra.mxu0 0
    %307 = vmatprep.mubr.bf16.mxu0 0
    %308 = vmatmul.mubr.bf16.gmra.mxu0 %v273
    %v309 = vpop.f32.mrf.mxu0
    %v310 = vadd.f32 %v224, %v309
    %v311 = vpop.f32.mrf.mxu0
    %v312 = vadd.f32 %v228, %v311
    %v313 = vpop.f32.mrf.mxu0
    %v314 = vpop.f32.mrf.mxu0
    %315 = vdwg.mxu0
    %v316 = vadd.f32 %v172, %v310
    %v317 = vxor.u32 %v316, 2147483648
    %v318 = vmul.f32 %v317, 1.442695
    %v319 = vpow.pop %v318
    %v320 = vadd.f32 %v319, 1.0
    %v321 = vrcp.pop %v320
    %v322 = vmul.f32 1.0, %v321
    %324 = vrot.lane.b32.xlu0 %v310, 64
    %v325 = vpop.permute.xlu0 %324
    %v327 = vmul.f32 %v322, %v325
    %329 = vrot.lane.b32.xlu0 %v327, 64
    %v330 = vpop.permute.xlu0 %329
    %v332 = vadd.f32 %v172, %v330
    %v333 = vtanh.pop %v332
    %v334 = vsub.f32 1.0, %v322
    %336 = vrot.lane.b32.xlu0 %v333, 96
    %v337 = vpop.permute.xlu0 %336
    %v339 = vmul.f32 %v334, %v337
    %v340 = vmul.f32 %v322, 0.0
    %v341 = vadd.f32 %v339, %v340
    %v342 = vadd.f32 %v206, %v310
    %v343 = vxor.u32 %v342, 2147483648
    %v344 = vmul.f32 %v343, 1.442695
    %v345 = vpow.pop %v344
    %v346 = vadd.f32 %v345, 1.0
    %v347 = vrcp.pop %v346
    %v348 = vmul.f32 1.0, %v347
    %v349 = vadd.f32 %v208, %v312
    %v350 = vxor.u32 %v349, 2147483648
    %v351 = vmul.f32 %v350, 1.442695
    %v352 = vpow.pop %v351
    %v353 = vadd.f32 %v352, 1.0
    %v354 = vrcp.pop %v353
    %v355 = vmul.f32 1.0, %v354
    %357 = vrot.lane.b32.xlu0 %v312, 64
    %v358 = vpop.permute.xlu0 %357
    %v360 = vmul.f32 %v348, %v358
    %362 = vrot.lane.b32.xlu0 %v360, 64
    %v363 = vpop.permute.xlu0 %362
    %v365 = vadd.f32 %v208, %v363
    %v366 = vtanh.pop %v365
    %v367 = vsub.f32 1.0, %v355
    %369 = vrot.lane.b32.xlu0 %v366, 96
    %v370 = vpop.permute.xlu0 %369
    %v372 = vmul.f32 %v367, %v370
    %v373 = vmul.f32 %v355, 0.0
    %v374 = vadd.f32 %v372, %v373
    %376 = vset.pattern.permute.xlu0 0
    %377 = vperm.xlu0 %376, %v67
    %v378 = vpop.permute.xlu0 %377
    %v380 = vmul.f32 %v378, %v341
    %v381 = vadd.f32 %v380, 0.0
    %382 = vset.pattern.permute.xlu0 7
    %383 = vperm.xlu0 %382, %v67
    %v384 = vpop.permute.xlu0 %383
    %v386 = vmul.f32 %v384, %v374
    %v387 = vadd.f32 %v386, 0.0
    %389 = vrot.lane.b32.xlu0 %v381, 96
    %v390 = vpop.permute.xlu0 %389
    %393 = vrot.lane.b32.xlu0 %v387, 32
    %v394 = vpop.permute.xlu0 %393
    %v396 = vsel %vm124, %v390, %v394
    %v397 = vpack.c.bf16 %v396, %v396
    %v399 = vsel %vm271, %v397, 0
    %401 = vmatprep.subr.bf16.mxu0 0
    %402 = vmatpush1.bf16.msra.mxu0 0
    %403 = vmatprep.subr.bf16.mxu0 0
    %404 = vmatpush1.bf16.msra.mxu0 0
    %405 = vmatprep.subr.bf16.mxu0 0
    %406 = vmatpush1.bf16.msra.mxu0 0
    %407 = vmatprep.subr.bf16.mxu0 0
    %408 = vmatpush1.bf16.msra.mxu0 0
    %409 = vmatprep.subr.bf16.mxu0 %v262
    %410 = vmatpush1.bf16.msra.mxu0 %v261
    %411 = vmatprep.subr.bf16.mxu0 %v260
    %412 = vmatpush1.bf16.msra.mxu0 %v259
    %413 = vmatprep.subr.bf16.mxu0 %v258
    %414 = vmatpush1.bf16.msra.mxu0 %v257
    %415 = vmatprep.subr.bf16.mxu0 %v256
    %416 = vmatpush1.bf16.msra.mxu0 %v255
    %417 = vmatprep.subr.bf16.mxu0 0
    %418 = vmatpush2.bf16.msra.mxu0 0
    %419 = vmatprep.subr.bf16.mxu0 0
    %420 = vmatpush2.bf16.msra.mxu0 0
    %421 = vmatprep.subr.bf16.mxu0 0
    %422 = vmatpush2.bf16.msra.mxu0 0
    %423 = vmatprep.subr.bf16.mxu0 0
    %424 = vmatpush2.bf16.msra.mxu0 0
    %425 = vmatprep.subr.bf16.mxu0 0
    %426 = vmatpush2.bf16.msra.mxu0 0
    %427 = vmatprep.subr.bf16.mxu0 0
    %428 = vmatpush2.bf16.msra.mxu0 0
    %429 = vmatprep.subr.bf16.mxu0 0
    %430 = vmatpush2.bf16.msra.mxu0 0
    %431 = vmatprep.subr.bf16.mxu0 0
    %432 = vmatpush2.bf16.msra.mxu0 0
    %433 = vmatprep.mubr.bf16.mxu0 0
    %434 = vmatmul.mubr.bf16.gmra.mxu0 %v399
    %v435 = vpop.f32.mrf.mxu0
    %v436 = vadd.f32 %v224, %v435
    %v437 = vpop.f32.mrf.mxu0
    %v438 = vadd.f32 %v228, %v437
    %v439 = vpop.f32.mrf.mxu0
    %v440 = vpop.f32.mrf.mxu0
    %441 = vdwg.mxu0
    %v442 = vadd.f32 %v176, %v436
    %v443 = vxor.u32 %v442, 2147483648
    %v444 = vmul.f32 %v443, 1.442695
    %v445 = vpow.pop %v444
    %v446 = vadd.f32 %v445, 1.0
    %v447 = vrcp.pop %v446
    %v448 = vmul.f32 1.0, %v447
    %450 = vrot.lane.b32.xlu0 %v436, 64
    %v451 = vpop.permute.xlu0 %450
    %v453 = vmul.f32 %v448, %v451
    %455 = vrot.lane.b32.xlu0 %v453, 64
    %v456 = vpop.permute.xlu0 %455
    %v458 = vadd.f32 %v176, %v456
    %v459 = vtanh.pop %v458
    %v460 = vsub.f32 1.0, %v448
    %462 = vrot.lane.b32.xlu0 %v459, 96
    %v463 = vpop.permute.xlu0 %462
    %v465 = vmul.f32 %v460, %v463
    %v466 = vmul.f32 %v448, %v381
    %v467 = vadd.f32 %v465, %v466
    %v468 = vadd.f32 %v202, %v436
    %v469 = vxor.u32 %v468, 2147483648
    %v470 = vmul.f32 %v469, 1.442695
    %v471 = vpow.pop %v470
    %v472 = vadd.f32 %v471, 1.0
    %v473 = vrcp.pop %v472
    %v474 = vmul.f32 1.0, %v473
    %v475 = vadd.f32 %v204, %v438
    %v476 = vxor.u32 %v475, 2147483648
    %v477 = vmul.f32 %v476, 1.442695
    %v478 = vpow.pop %v477
    %v479 = vadd.f32 %v478, 1.0
    %v480 = vrcp.pop %v479
    %v481 = vmul.f32 1.0, %v480
    %483 = vrot.lane.b32.xlu0 %v438, 64
    %v484 = vpop.permute.xlu0 %483
    %v486 = vmul.f32 %v474, %v484
    %488 = vrot.lane.b32.xlu0 %v486, 64
    %v489 = vpop.permute.xlu0 %488
    %v491 = vadd.f32 %v204, %v489
    %v492 = vtanh.pop %v491
    %v493 = vsub.f32 1.0, %v481
    %495 = vrot.lane.b32.xlu0 %v492, 96
    %v496 = vpop.permute.xlu0 %495
    %v498 = vmul.f32 %v493, %v496
    %v499 = vmul.f32 %v481, %v387
    %v500 = vadd.f32 %v498, %v499
    %v501 = vsub.f32 %v467, %v381
    %502 = vset.pattern.permute.xlu0 1
    %503 = vperm.xlu0 %502, %v67
    %v504 = vpop.permute.xlu0 %503
    %v506 = vmul.f32 %v504, %v501
    %v507 = vadd.f32 %v381, %v506
    %v508 = vsub.f32 %v500, %v387
    %509 = vset.pattern.permute.xlu0 6
    %510 = vperm.xlu0 %509, %v67
    %v511 = vpop.permute.xlu0 %510
    %v513 = vmul.f32 %v511, %v508
    %v514 = vadd.f32 %v387, %v513
    %516 = vrot.lane.b32.xlu0 %v507, 96
    %v517 = vpop.permute.xlu0 %516
    %520 = vrot.lane.b32.xlu0 %v514, 32
    %v521 = vpop.permute.xlu0 %520
    %v523 = vsel %vm124, %v517, %v521
    %v524 = vpack.c.bf16 %v523, %v523
    %v526 = vsel %vm271, %v524, 0
    %528 = vmatprep.subr.bf16.mxu0 0
    %529 = vmatpush1.bf16.msra.mxu0 0
    %530 = vmatprep.subr.bf16.mxu0 0
    %531 = vmatpush1.bf16.msra.mxu0 0
    %532 = vmatprep.subr.bf16.mxu0 0
    %533 = vmatpush1.bf16.msra.mxu0 0
    %534 = vmatprep.subr.bf16.mxu0 0
    %535 = vmatpush1.bf16.msra.mxu0 0
    %536 = vmatprep.subr.bf16.mxu0 %v262
    %537 = vmatpush1.bf16.msra.mxu0 %v261
    %538 = vmatprep.subr.bf16.mxu0 %v260
    %539 = vmatpush1.bf16.msra.mxu0 %v259
    %540 = vmatprep.subr.bf16.mxu0 %v258
    %541 = vmatpush1.bf16.msra.mxu0 %v257
    %542 = vmatprep.subr.bf16.mxu0 %v256
    %543 = vmatpush1.bf16.msra.mxu0 %v255
    %544 = vmatprep.subr.bf16.mxu0 0
    %545 = vmatpush2.bf16.msra.mxu0 0
    %546 = vmatprep.subr.bf16.mxu0 0
    %547 = vmatpush2.bf16.msra.mxu0 0
    %548 = vmatprep.subr.bf16.mxu0 0
    %549 = vmatpush2.bf16.msra.mxu0 0
    %550 = vmatprep.subr.bf16.mxu0 0
    %551 = vmatpush2.bf16.msra.mxu0 0
    %552 = vmatprep.subr.bf16.mxu0 0
    %553 = vmatpush2.bf16.msra.mxu0 0
    %554 = vmatprep.subr.bf16.mxu0 0
    %555 = vmatpush2.bf16.msra.mxu0 0
    %556 = vmatprep.subr.bf16.mxu0 0
    %557 = vmatpush2.bf16.msra.mxu0 0
    %558 = vmatprep.subr.bf16.mxu0 0
    %559 = vmatpush2.bf16.msra.mxu0 0
    %560 = vmatprep.mubr.bf16.mxu0 0
    %561 = vmatmul.mubr.bf16.gmra.mxu0 %v526
    %v562 = vpop.f32.mrf.mxu0
    %v563 = vadd.f32 %v224, %v562
    %v564 = vpop.f32.mrf.mxu0
    %v565 = vadd.f32 %v228, %v564
    %v566 = vpop.f32.mrf.mxu0
    %v567 = vpop.f32.mrf.mxu0
    %568 = vdwg.mxu0
    %v569 = vadd.f32 %v182, %v563
    %v570 = vxor.u32 %v569, 2147483648
    %v571 = vmul.f32 %v570, 1.442695
    %v572 = vpow.pop %v571
    %v573 = vadd.f32 %v572, 1.0
    %v574 = vrcp.pop %v573
    %v575 = vmul.f32 1.0, %v574
    %577 = vrot.lane.b32.xlu0 %v563, 64
    %v578 = vpop.permute.xlu0 %577
    %v580 = vmul.f32 %v575, %v578
    %582 = vrot.lane.b32.xlu0 %v580, 64
    %v583 = vpop.permute.xlu0 %582
    %v585 = vadd.f32 %v182, %v583
    %v586 = vtanh.pop %v585
    %v587 = vsub.f32 1.0, %v575
    %589 = vrot.lane.b32.xlu0 %v586, 96
    %v590 = vpop.permute.xlu0 %589
    %v592 = vmul.f32 %v587, %v590
    %v593 = vmul.f32 %v575, %v507
    %v594 = vadd.f32 %v592, %v593
    %v595 = vadd.f32 %v196, %v563
    %v596 = vxor.u32 %v595, 2147483648
    %v597 = vmul.f32 %v596, 1.442695
    %v598 = vpow.pop %v597
    %v599 = vadd.f32 %v598, 1.0
    %v600 = vrcp.pop %v599
    %v601 = vmul.f32 1.0, %v600
    %v602 = vadd.f32 %v198, %v565
    %v603 = vxor.u32 %v602, 2147483648
    %v604 = vmul.f32 %v603, 1.442695
    %v605 = vpow.pop %v604
    %v606 = vadd.f32 %v605, 1.0
    %v607 = vrcp.pop %v606
    %v608 = vmul.f32 1.0, %v607
    %610 = vrot.lane.b32.xlu0 %v565, 64
    %v611 = vpop.permute.xlu0 %610
    %v613 = vmul.f32 %v601, %v611
    %615 = vrot.lane.b32.xlu0 %v613, 64
    %v616 = vpop.permute.xlu0 %615
    %v618 = vadd.f32 %v198, %v616
    %v619 = vtanh.pop %v618
    %v620 = vsub.f32 1.0, %v608
    %622 = vrot.lane.b32.xlu0 %v619, 96
    %v623 = vpop.permute.xlu0 %622
    %v625 = vmul.f32 %v620, %v623
    %v626 = vmul.f32 %v608, %v514
    %v627 = vadd.f32 %v625, %v626
    %v628 = vsub.f32 %v594, %v507
    %629 = vset.pattern.permute.xlu0 2
    %630 = vperm.xlu0 %629, %v67
    %v631 = vpop.permute.xlu0 %630
    %v633 = vmul.f32 %v631, %v628
    %v634 = vadd.f32 %v507, %v633
    %v635 = vsub.f32 %v627, %v514
    %636 = vset.pattern.permute.xlu0 5
    %637 = vperm.xlu0 %636, %v67
    %v638 = vpop.permute.xlu0 %637
    %v640 = vmul.f32 %v638, %v635
    %v641 = vadd.f32 %v514, %v640
    %643 = vrot.lane.b32.xlu0 %v634, 96
    %v644 = vpop.permute.xlu0 %643
    %647 = vrot.lane.b32.xlu0 %v641, 32
    %v648 = vpop.permute.xlu0 %647
    %v650 = vsel %vm124, %v644, %v648
    %v651 = vpack.c.bf16 %v650, %v650
    %v653 = vsel %vm271, %v651, 0
    %655 = vmatprep.subr.bf16.mxu0 0
    %656 = vmatpush1.bf16.msra.mxu0 0
    %657 = vmatprep.subr.bf16.mxu0 0
    %658 = vmatpush1.bf16.msra.mxu0 0
    %659 = vmatprep.subr.bf16.mxu0 0
    %660 = vmatpush1.bf16.msra.mxu0 0
    %661 = vmatprep.subr.bf16.mxu0 0
    %662 = vmatpush1.bf16.msra.mxu0 0
    %663 = vmatprep.subr.bf16.mxu0 %v262
    %664 = vmatpush1.bf16.msra.mxu0 %v261
    %665 = vmatprep.subr.bf16.mxu0 %v260
    %666 = vmatpush1.bf16.msra.mxu0 %v259
    %667 = vmatprep.subr.bf16.mxu0 %v258
    %668 = vmatpush1.bf16.msra.mxu0 %v257
    %669 = vmatprep.subr.bf16.mxu0 %v256
    %670 = vmatpush1.bf16.msra.mxu0 %v255
    %671 = vmatprep.subr.bf16.mxu0 0
    %672 = vmatpush2.bf16.msra.mxu0 0
    %673 = vmatprep.subr.bf16.mxu0 0
    %674 = vmatpush2.bf16.msra.mxu0 0
    %675 = vmatprep.subr.bf16.mxu0 0
    %676 = vmatpush2.bf16.msra.mxu0 0
    %677 = vmatprep.subr.bf16.mxu0 0
    %678 = vmatpush2.bf16.msra.mxu0 0
    %679 = vmatprep.subr.bf16.mxu0 0
    %680 = vmatpush2.bf16.msra.mxu0 0
    %681 = vmatprep.subr.bf16.mxu0 0
    %682 = vmatpush2.bf16.msra.mxu0 0
    %683 = vmatprep.subr.bf16.mxu0 0
    %684 = vmatpush2.bf16.msra.mxu0 0
    %685 = vmatprep.subr.bf16.mxu0 0
    %686 = vmatpush2.bf16.msra.mxu0 0
    %687 = vmatprep.mubr.bf16.mxu0 0
    %688 = vmatmul.mubr.bf16.gmra.mxu0 %v653
    %v689 = vpop.f32.mrf.mxu0
    %v690 = vadd.f32 %v224, %v689
    %v691 = vpop.f32.mrf.mxu0
    %v692 = vadd.f32 %v228, %v691
    %v693 = vpop.f32.mrf.mxu0
    %v694 = vpop.f32.mrf.mxu0
    %695 = vdwg.mxu0
    %v696 = vadd.f32 %v186, %v690
    %v697 = vxor.u32 %v696, 2147483648
    %v698 = vmul.f32 %v697, 1.442695
    %v699 = vpow.pop %v698
    %v700 = vadd.f32 %v699, 1.0
    %v701 = vrcp.pop %v700
    %v702 = vmul.f32 1.0, %v701
    %704 = vrot.lane.b32.xlu0 %v690, 64
    %v705 = vpop.permute.xlu0 %704
    %v707 = vmul.f32 %v702, %v705
    %709 = vrot.lane.b32.xlu0 %v707, 64
    %v710 = vpop.permute.xlu0 %709
    %v712 = vadd.f32 %v186, %v710
    %v713 = vtanh.pop %v712
    %v714 = vsub.f32 1.0, %v702
    %716 = vrot.lane.b32.xlu0 %v713, 96
    %v717 = vpop.permute.xlu0 %716
    %v719 = vmul.f32 %v714, %v717
    %v720 = vmul.f32 %v702, %v634
    %v721 = vadd.f32 %v719, %v720
    %v722 = vadd.f32 %v192, %v690
    %v723 = vxor.u32 %v722, 2147483648
    %v724 = vmul.f32 %v723, 1.442695
    %v725 = vpow.pop %v724
    %v726 = vadd.f32 %v725, 1.0
    %v727 = vrcp.pop %v726
    %v728 = vmul.f32 1.0, %v727
    %v729 = vadd.f32 %v194, %v692
    %v730 = vxor.u32 %v729, 2147483648
    %v731 = vmul.f32 %v730, 1.442695
    %v732 = vpow.pop %v731
    %v733 = vadd.f32 %v732, 1.0
    %v734 = vrcp.pop %v733
    %v735 = vmul.f32 1.0, %v734
    %737 = vrot.lane.b32.xlu0 %v692, 64
    %v738 = vpop.permute.xlu0 %737
    %v740 = vmul.f32 %v728, %v738
    %742 = vrot.lane.b32.xlu0 %v740, 64
    %v743 = vpop.permute.xlu0 %742
    %v745 = vadd.f32 %v194, %v743
    %v746 = vtanh.pop %v745
    %v747 = vsub.f32 1.0, %v735
    %749 = vrot.lane.b32.xlu0 %v746, 96
    %v750 = vpop.permute.xlu0 %749
    %v752 = vmul.f32 %v747, %v750
    %v753 = vmul.f32 %v735, %v641
    %v754 = vadd.f32 %v752, %v753
    %v755 = vsub.f32 %v721, %v634
    %756 = vset.pattern.permute.xlu0 3
    %757 = vperm.xlu0 %756, %v67
    %v758 = vpop.permute.xlu0 %757
    %v760 = vmul.f32 %v758, %v755
    %v761 = vadd.f32 %v634, %v760
    %v762 = vsub.f32 %v754, %v641
    %763 = vset.pattern.permute.xlu0 4
    %764 = vperm.xlu0 %763, %v67
    %v765 = vpop.permute.xlu0 %764
    %v767 = vmul.f32 %v765, %v762
    %v768 = vadd.f32 %v641, %v767
    %770 = vrot.lane.b32.xlu0 %v761, 96
    %v771 = vpop.permute.xlu0 %770
    %774 = vrot.lane.b32.xlu0 %v768, 32
    %v775 = vpop.permute.xlu0 %774
    %v777 = vsel %vm124, %v771, %v775
    %v778 = vpack.c.bf16 %v777, %v777
    %v780 = vsel %vm271, %v778, 0
    %782 = vmatprep.subr.bf16.mxu0 0
    %783 = vmatpush1.bf16.msra.mxu0 0
    %784 = vmatprep.subr.bf16.mxu0 0
    %785 = vmatpush1.bf16.msra.mxu0 0
    %786 = vmatprep.subr.bf16.mxu0 0
    %787 = vmatpush1.bf16.msra.mxu0 0
    %788 = vmatprep.subr.bf16.mxu0 0
    %789 = vmatpush1.bf16.msra.mxu0 0
    %790 = vmatprep.subr.bf16.mxu0 %v262
    %791 = vmatpush1.bf16.msra.mxu0 %v261
    %792 = vmatprep.subr.bf16.mxu0 %v260
    %793 = vmatpush1.bf16.msra.mxu0 %v259
    %794 = vmatprep.subr.bf16.mxu0 %v258
    %795 = vmatpush1.bf16.msra.mxu0 %v257
    %796 = vmatprep.subr.bf16.mxu0 %v256
    %797 = vmatpush1.bf16.msra.mxu0 %v255
    %798 = vmatprep.subr.bf16.mxu0 0
    %799 = vmatpush2.bf16.msra.mxu0 0
    %800 = vmatprep.subr.bf16.mxu0 0
    %801 = vmatpush2.bf16.msra.mxu0 0
    %802 = vmatprep.subr.bf16.mxu0 0
    %803 = vmatpush2.bf16.msra.mxu0 0
    %804 = vmatprep.subr.bf16.mxu0 0
    %805 = vmatpush2.bf16.msra.mxu0 0
    %806 = vmatprep.subr.bf16.mxu0 0
    %807 = vmatpush2.bf16.msra.mxu0 0
    %808 = vmatprep.subr.bf16.mxu0 0
    %809 = vmatpush2.bf16.msra.mxu0 0
    %810 = vmatprep.subr.bf16.mxu0 0
    %811 = vmatpush2.bf16.msra.mxu0 0
    %812 = vmatprep.subr.bf16.mxu0 0
    %813 = vmatpush2.bf16.msra.mxu0 0
    %814 = vmatprep.mubr.bf16.mxu0 0
    %815 = vmatmul.mubr.bf16.gmra.mxu0 %v780
    %v816 = vpop.f32.mrf.mxu0
    %v817 = vadd.f32 %v224, %v816
    %v818 = vpop.f32.mrf.mxu0
    %v819 = vadd.f32 %v228, %v818
    %v820 = vpop.f32.mrf.mxu0
    %v821 = vpop.f32.mrf.mxu0
    %822 = vdwg.mxu0
    %v823 = vadd.f32 %v192, %v817
    %v824 = vxor.u32 %v823, 2147483648
    %v825 = vmul.f32 %v824, 1.442695
    %v826 = vpow.pop %v825
    %v827 = vadd.f32 %v826, 1.0
    %v828 = vrcp.pop %v827
    %v829 = vmul.f32 1.0, %v828
    %831 = vrot.lane.b32.xlu0 %v817, 64
    %v832 = vpop.permute.xlu0 %831
    %v834 = vmul.f32 %v829, %v832
    %836 = vrot.lane.b32.xlu0 %v834, 64
    %v837 = vpop.permute.xlu0 %836
    %v839 = vadd.f32 %v192, %v837
    %v840 = vtanh.pop %v839
    %v841 = vsub.f32 1.0, %v829
    %843 = vrot.lane.b32.xlu0 %v840, 96
    %v844 = vpop.permute.xlu0 %843
    %v846 = vmul.f32 %v841, %v844
    %v847 = vmul.f32 %v829, %v761
    %v848 = vadd.f32 %v846, %v847
    %v849 = vadd.f32 %v186, %v817
    %v850 = vxor.u32 %v849, 2147483648
    %v851 = vmul.f32 %v850, 1.442695
    %v852 = vpow.pop %v851
    %v853 = vadd.f32 %v852, 1.0
    %v854 = vrcp.pop %v853
    %v855 = vmul.f32 1.0, %v854
    %v856 = vadd.f32 %v188, %v819
    %v857 = vxor.u32 %v856, 2147483648
    %v858 = vmul.f32 %v857, 1.442695
    %v859 = vpow.pop %v858
    %v860 = vadd.f32 %v859, 1.0
    %v861 = vrcp.pop %v860
    %v862 = vmul.f32 1.0, %v861
    %864 = vrot.lane.b32.xlu0 %v819, 64
    %v865 = vpop.permute.xlu0 %864
    %v867 = vmul.f32 %v855, %v865
    %869 = vrot.lane.b32.xlu0 %v867, 64
    %v870 = vpop.permute.xlu0 %869
    %v872 = vadd.f32 %v188, %v870
    %v873 = vtanh.pop %v872
    %v874 = vsub.f32 1.0, %v862
    %876 = vrot.lane.b32.xlu0 %v873, 96
    %v877 = vpop.permute.xlu0 %876
    %v879 = vmul.f32 %v874, %v877
    %v880 = vmul.f32 %v862, %v768
    %v881 = vadd.f32 %v879, %v880
    %v882 = vsub.f32 %v848, %v761
    %v883 = vmul.f32 %v765, %v882
    %v884 = vadd.f32 %v761, %v883
    %v885 = vsub.f32 %v881, %v768
    %v886 = vmul.f32 %v758, %v885
    %v887 = vadd.f32 %v768, %v886
    %889 = vrot.lane.b32.xlu0 %v884, 96
    %v890 = vpop.permute.xlu0 %889
    %893 = vrot.lane.b32.xlu0 %v887, 32
    %v894 = vpop.permute.xlu0 %893
    %v896 = vsel %vm124, %v890, %v894
    %v897 = vpack.c.bf16 %v896, %v896
    %v899 = vsel %vm271, %v897, 0
    %901 = vmatprep.subr.bf16.mxu0 0
    %902 = vmatpush1.bf16.msra.mxu0 0
    %903 = vmatprep.subr.bf16.mxu0 0
    %904 = vmatpush1.bf16.msra.mxu0 0
    %905 = vmatprep.subr.bf16.mxu0 0
    %906 = vmatpush1.bf16.msra.mxu0 0
    %907 = vmatprep.subr.bf16.mxu0 0
    %908 = vmatpush1.bf16.msra.mxu0 0
    %909 = vmatprep.subr.bf16.mxu0 %v262
    %910 = vmatpush1.bf16.msra.mxu0 %v261
    %911 = vmatprep.subr.bf16.mxu0 %v260
    %912 = vmatpush1.bf16.msra.mxu0 %v259
    %913 = vmatprep.subr.bf16.mxu0 %v258
    %914 = vmatpush1.bf16.msra.mxu0 %v257
    %915 = vmatprep.subr.bf16.mxu0 %v256
    %916 = vmatpush1.bf16.msra.mxu0 %v255
    %917 = vmatprep.subr.bf16.mxu0 0
    %918 = vmatpush2.bf16.msra.mxu0 0
    %919 = vmatprep.subr.bf16.mxu0 0
    %920 = vmatpush2.bf16.msra.mxu0 0
    %921 = vmatprep.subr.bf16.mxu0 0
    %922 = vmatpush2.bf16.msra.mxu0 0
    %923 = vmatprep.subr.bf16.mxu0 0
    %924 = vmatpush2.bf16.msra.mxu0 0
    %925 = vmatprep.subr.bf16.mxu0 0
    %926 = vmatpush2.bf16.msra.mxu0 0
    %927 = vmatprep.subr.bf16.mxu0 0
    %928 = vmatpush2.bf16.msra.mxu0 0
    %929 = vmatprep.subr.bf16.mxu0 0
    %930 = vmatpush2.bf16.msra.mxu0 0
    %931 = vmatprep.subr.bf16.mxu0 0
    %932 = vmatpush2.bf16.msra.mxu0 0
    %933 = vmatprep.mubr.bf16.mxu0 0
    %934 = vmatmul.mubr.bf16.gmra.mxu0 %v899
    %v935 = vpop.f32.mrf.mxu0
    %v936 = vadd.f32 %v224, %v935
    %v937 = vpop.f32.mrf.mxu0
    %v938 = vadd.f32 %v228, %v937
    %v939 = vpop.f32.mrf.mxu0
    %v940 = vpop.f32.mrf.mxu0
    %941 = vdwg.mxu0
    %v942 = vadd.f32 %v196, %v936
    %v943 = vxor.u32 %v942, 2147483648
    %v944 = vmul.f32 %v943, 1.442695
    %v945 = vpow.pop %v944
    %v946 = vadd.f32 %v945, 1.0
    %v947 = vrcp.pop %v946
    %v948 = vmul.f32 1.0, %v947
    %950 = vrot.lane.b32.xlu0 %v936, 64
    %v951 = vpop.permute.xlu0 %950
    %v953 = vmul.f32 %v948, %v951
    %955 = vrot.lane.b32.xlu0 %v953, 64
    %v956 = vpop.permute.xlu0 %955
    %v958 = vadd.f32 %v196, %v956
    %v959 = vtanh.pop %v958
    %v960 = vsub.f32 1.0, %v948
    %962 = vrot.lane.b32.xlu0 %v959, 96
    %v963 = vpop.permute.xlu0 %962
    %v965 = vmul.f32 %v960, %v963
    %v966 = vmul.f32 %v948, %v884
    %v967 = vadd.f32 %v965, %v966
    %v968 = vadd.f32 %v182, %v936
    %v969 = vxor.u32 %v968, 2147483648
    %v970 = vmul.f32 %v969, 1.442695
    %v971 = vpow.pop %v970
    %v972 = vadd.f32 %v971, 1.0
    %v973 = vrcp.pop %v972
    %v974 = vmul.f32 1.0, %v973
    %v975 = vadd.f32 %v184, %v938
    %v976 = vxor.u32 %v975, 2147483648
    %v977 = vmul.f32 %v976, 1.442695
    %v978 = vpow.pop %v977
    %v979 = vadd.f32 %v978, 1.0
    %v980 = vrcp.pop %v979
    %v981 = vmul.f32 1.0, %v980
    %983 = vrot.lane.b32.xlu0 %v938, 64
    %v984 = vpop.permute.xlu0 %983
    %v986 = vmul.f32 %v974, %v984
    %988 = vrot.lane.b32.xlu0 %v986, 64
    %v989 = vpop.permute.xlu0 %988
    %v991 = vadd.f32 %v184, %v989
    %v992 = vtanh.pop %v991
    %v993 = vsub.f32 1.0, %v981
    %995 = vrot.lane.b32.xlu0 %v992, 96
    %v996 = vpop.permute.xlu0 %995
    %v998 = vmul.f32 %v993, %v996
    %v999 = vmul.f32 %v981, %v887
    %v1000 = vadd.f32 %v998, %v999
    %v1001 = vsub.f32 %v967, %v884
    %v1002 = vmul.f32 %v638, %v1001
    %v1003 = vadd.f32 %v884, %v1002
    %v1004 = vsub.f32 %v1000, %v887
    %v1005 = vmul.f32 %v631, %v1004
    %v1006 = vadd.f32 %v887, %v1005
    %1008 = vrot.lane.b32.xlu0 %v1003, 96
    %v1009 = vpop.permute.xlu0 %1008
    %1012 = vrot.lane.b32.xlu0 %v1006, 32
    %v1013 = vpop.permute.xlu0 %1012
    %v1015 = vsel %vm124, %v1009, %v1013
    %v1016 = vpack.c.bf16 %v1015, %v1015
    %v1018 = vsel %vm271, %v1016, 0
    %1020 = vmatprep.subr.bf16.mxu0 0
    %1021 = vmatpush1.bf16.msra.mxu0 0
    %1022 = vmatprep.subr.bf16.mxu0 0
    %1023 = vmatpush1.bf16.msra.mxu0 0
    %1024 = vmatprep.subr.bf16.mxu0 0
    %1025 = vmatpush1.bf16.msra.mxu0 0
    %1026 = vmatprep.subr.bf16.mxu0 0
    %1027 = vmatpush1.bf16.msra.mxu0 0
    %1028 = vmatprep.subr.bf16.mxu0 %v262
    %1029 = vmatpush1.bf16.msra.mxu0 %v261
    %1030 = vmatprep.subr.bf16.mxu0 %v260
    %1031 = vmatpush1.bf16.msra.mxu0 %v259
    %1032 = vmatprep.subr.bf16.mxu0 %v258
    %1033 = vmatpush1.bf16.msra.mxu0 %v257
    %1034 = vmatprep.subr.bf16.mxu0 %v256
    %1035 = vmatpush1.bf16.msra.mxu0 %v255
    %1036 = vmatprep.subr.bf16.mxu0 0
    %1037 = vmatpush2.bf16.msra.mxu0 0
    %1038 = vmatprep.subr.bf16.mxu0 0
    %1039 = vmatpush2.bf16.msra.mxu0 0
    %1040 = vmatprep.subr.bf16.mxu0 0
    %1041 = vmatpush2.bf16.msra.mxu0 0
    %1042 = vmatprep.subr.bf16.mxu0 0
    %1043 = vmatpush2.bf16.msra.mxu0 0
    %1044 = vmatprep.subr.bf16.mxu0 0
    %1045 = vmatpush2.bf16.msra.mxu0 0
    %1046 = vmatprep.subr.bf16.mxu0 0
    %1047 = vmatpush2.bf16.msra.mxu0 0
    %1048 = vmatprep.subr.bf16.mxu0 0
    %1049 = vmatpush2.bf16.msra.mxu0 0
    %1050 = vmatprep.subr.bf16.mxu0 0
    %1051 = vmatpush2.bf16.msra.mxu0 0
    %1052 = vmatprep.mubr.bf16.mxu0 0
    %1053 = vmatmul.mubr.bf16.gmra.mxu0 %v1018
    %v1054 = vpop.f32.mrf.mxu0
    %v1055 = vadd.f32 %v224, %v1054
    %v1056 = vpop.f32.mrf.mxu0
    %v1057 = vadd.f32 %v228, %v1056
    %v1058 = vpop.f32.mrf.mxu0
    %v1059 = vpop.f32.mrf.mxu0
    %1060 = vdwg.mxu0
    %v1061 = vadd.f32 %v202, %v1055
    %v1062 = vxor.u32 %v1061, 2147483648
    %v1063 = vmul.f32 %v1062, 1.442695
    %v1064 = vpow.pop %v1063
    %v1065 = vadd.f32 %v1064, 1.0
    %v1066 = vrcp.pop %v1065
    %v1067 = vmul.f32 1.0, %v1066
    %1069 = vrot.lane.b32.xlu0 %v1055, 64
    %v1070 = vpop.permute.xlu0 %1069
    %v1072 = vmul.f32 %v1067, %v1070
    %1074 = vrot.lane.b32.xlu0 %v1072, 64
    %v1075 = vpop.permute.xlu0 %1074
    %v1077 = vadd.f32 %v202, %v1075
    %v1078 = vtanh.pop %v1077
    %v1079 = vsub.f32 1.0, %v1067
    %1081 = vrot.lane.b32.xlu0 %v1078, 96
    %v1082 = vpop.permute.xlu0 %1081
    %v1084 = vmul.f32 %v1079, %v1082
    %v1085 = vmul.f32 %v1067, %v1003
    %v1086 = vadd.f32 %v1084, %v1085
    %v1087 = vadd.f32 %v176, %v1055
    %v1088 = vxor.u32 %v1087, 2147483648
    %v1089 = vmul.f32 %v1088, 1.442695
    %v1090 = vpow.pop %v1089
    %v1091 = vadd.f32 %v1090, 1.0
    %v1092 = vrcp.pop %v1091
    %v1093 = vmul.f32 1.0, %v1092
    %v1094 = vadd.f32 %v178, %v1057
    %v1095 = vxor.u32 %v1094, 2147483648
    %v1096 = vmul.f32 %v1095, 1.442695
    %v1097 = vpow.pop %v1096
    %v1098 = vadd.f32 %v1097, 1.0
    %v1099 = vrcp.pop %v1098
    %v1100 = vmul.f32 1.0, %v1099
    %1102 = vrot.lane.b32.xlu0 %v1057, 64
    %v1103 = vpop.permute.xlu0 %1102
    %v1105 = vmul.f32 %v1093, %v1103
    %1107 = vrot.lane.b32.xlu0 %v1105, 64
    %v1108 = vpop.permute.xlu0 %1107
    %v1110 = vadd.f32 %v178, %v1108
    %v1111 = vtanh.pop %v1110
    %v1112 = vsub.f32 1.0, %v1100
    %1114 = vrot.lane.b32.xlu0 %v1111, 96
    %v1115 = vpop.permute.xlu0 %1114
    %v1117 = vmul.f32 %v1112, %v1115
    %v1118 = vmul.f32 %v1100, %v1006
    %v1119 = vadd.f32 %v1117, %v1118
    %v1120 = vsub.f32 %v1086, %v1003
    %v1121 = vmul.f32 %v511, %v1120
    %v1122 = vadd.f32 %v1003, %v1121
    %v1123 = vsub.f32 %v1119, %v1006
    %v1124 = vmul.f32 %v504, %v1123
    %v1125 = vadd.f32 %v1006, %v1124
    %1127 = vrot.lane.b32.xlu0 %v1122, 96
    %v1128 = vpop.permute.xlu0 %1127
    %1131 = vrot.lane.b32.xlu0 %v1125, 32
    %v1132 = vpop.permute.xlu0 %1131
    %v1134 = vsel %vm124, %v1128, %v1132
    %v1135 = vpack.c.bf16 %v1134, %v1134
    %v1137 = vsel %vm271, %v1135, 0
    %1139 = vmatprep.subr.bf16.mxu0 0
    %1140 = vmatpush1.bf16.msra.mxu0 0
    %1141 = vmatprep.subr.bf16.mxu0 0
    %1142 = vmatpush1.bf16.msra.mxu0 0
    %1143 = vmatprep.subr.bf16.mxu0 0
    %1144 = vmatpush1.bf16.msra.mxu0 0
    %1145 = vmatprep.subr.bf16.mxu0 0
    %1146 = vmatpush1.bf16.msra.mxu0 0
    %1147 = vmatprep.subr.bf16.mxu0 %v262
    %1148 = vmatpush1.bf16.msra.mxu0 %v261
    %1149 = vmatprep.subr.bf16.mxu0 %v260
    %1150 = vmatpush1.bf16.msra.mxu0 %v259
    %1151 = vmatprep.subr.bf16.mxu0 %v258
    %1152 = vmatpush1.bf16.msra.mxu0 %v257
    %1153 = vmatprep.subr.bf16.mxu0 %v256
    %1154 = vmatpush1.bf16.msra.mxu0 %v255
    %1155 = vmatprep.subr.bf16.mxu0 0
    %1156 = vmatpush2.bf16.msra.mxu0 0
    %1157 = vmatprep.subr.bf16.mxu0 0
    %1158 = vmatpush2.bf16.msra.mxu0 0
    %1159 = vmatprep.subr.bf16.mxu0 0
    %1160 = vmatpush2.bf16.msra.mxu0 0
    %1161 = vmatprep.subr.bf16.mxu0 0
    %1162 = vmatpush2.bf16.msra.mxu0 0
    %1163 = vmatprep.subr.bf16.mxu0 0
    %1164 = vmatpush2.bf16.msra.mxu0 0
    %1165 = vmatprep.subr.bf16.mxu0 0
    %1166 = vmatpush2.bf16.msra.mxu0 0
    %1167 = vmatprep.subr.bf16.mxu0 0
    %1168 = vmatpush2.bf16.msra.mxu0 0
    %1169 = vmatprep.subr.bf16.mxu0 0
    %1170 = vmatpush2.bf16.msra.mxu0 0
    %1171 = vmatprep.mubr.bf16.mxu0 0
    %1172 = vmatmul.mubr.bf16.gmra.mxu0 %v1137
    %v1173 = vpop.f32.mrf.mxu0
    %v1174 = vadd.f32 %v224, %v1173
    %v1175 = vpop.f32.mrf.mxu0
    %v1176 = vadd.f32 %v228, %v1175
    %v1177 = vpop.f32.mrf.mxu0
    %v1178 = vpop.f32.mrf.mxu0
    %1179 = vdwg.mxu0
    %v1180 = vadd.f32 %v206, %v1174
    %v1181 = vxor.u32 %v1180, 2147483648
    %v1182 = vmul.f32 %v1181, 1.442695
    %v1183 = vpow.pop %v1182
    %v1184 = vadd.f32 %v1183, 1.0
    %v1185 = vrcp.pop %v1184
    %v1186 = vmul.f32 1.0, %v1185
    %1188 = vrot.lane.b32.xlu0 %v1174, 64
    %v1189 = vpop.permute.xlu0 %1188
    %v1191 = vmul.f32 %v1186, %v1189
    %1193 = vrot.lane.b32.xlu0 %v1191, 64
    %v1194 = vpop.permute.xlu0 %1193
    %v1196 = vadd.f32 %v206, %v1194
    %v1197 = vtanh.pop %v1196
    %v1198 = vsub.f32 1.0, %v1186
    %1200 = vrot.lane.b32.xlu0 %v1197, 96
    %v1201 = vpop.permute.xlu0 %1200
    %v1203 = vmul.f32 %v1198, %v1201
    %v1204 = vmul.f32 %v1186, %v1122
    %v1205 = vadd.f32 %v1203, %v1204
    %v1206 = vadd.f32 %v172, %v1174
    %v1207 = vxor.u32 %v1206, 2147483648
    %v1208 = vmul.f32 %v1207, 1.442695
    %v1209 = vpow.pop %v1208
    %v1210 = vadd.f32 %v1209, 1.0
    %v1211 = vrcp.pop %v1210
    %v1212 = vmul.f32 1.0, %v1211
    %v1213 = vadd.f32 %v174, %v1176
    %v1214 = vxor.u32 %v1213, 2147483648
    %v1215 = vmul.f32 %v1214, 1.442695
    %v1216 = vpow.pop %v1215
    %v1217 = vadd.f32 %v1216, 1.0
    %v1218 = vrcp.pop %v1217
    %v1219 = vmul.f32 1.0, %v1218
    %1221 = vrot.lane.b32.xlu0 %v1176, 64
    %v1222 = vpop.permute.xlu0 %1221
    %v1224 = vmul.f32 %v1212, %v1222
    %1226 = vrot.lane.b32.xlu0 %v1224, 64
    %v1227 = vpop.permute.xlu0 %1226
    %v1229 = vadd.f32 %v174, %v1227
    %v1230 = vtanh.pop %v1229
    %v1231 = vsub.f32 1.0, %v1219
    %1233 = vrot.lane.b32.xlu0 %v1230, 96
    %v1234 = vpop.permute.xlu0 %1233
    %v1236 = vmul.f32 %v1231, %v1234
    %v1237 = vmul.f32 %v1219, %v1125
    %v1238 = vadd.f32 %v1236, %v1237
    %v1239 = vsub.f32 %v1205, %v1122
    %v1240 = vmul.f32 %v384, %v1239
    %v1241 = vadd.f32 %v1122, %v1240
    %v1242 = vsub.f32 %v1238, %v1125
    %v1243 = vmul.f32 %v378, %v1242
    %v1244 = vadd.f32 %v1125, %v1243
    %v1245 = vld [vmem:[#allocation5] sm:$0xff]
    %v1246 = vld [vmem:[#allocation5 + $0x8] sm:$0xff]
    %v1247 = vld [vmem:[#allocation5 + $0x10] sm:$0xff]
    %v1248 = vld [vmem:[#allocation5 + $0x18] sm:$0xff]
    %v1249 = vld [vmem:[%s7] sm:$0x1]
    %v1251 = vlaneseq
    %v1252 = vshrl.u32 %v1251, 7
    %v1253 = vsub.s32 0, %v1252
    %v1254 = vrot.slane %v1249, %v1253
    %v1257 = vsel %vm124, %v1244, 0
    %1259 = vmatprep.subr.mxu0 0.0
    %1260 = vmatpush1.msra.mxu0 0.0
    %1261 = vmatprep.subr.mxu0 0.0
    %1262 = vmatpush1.msra.mxu0 0.0
    %1263 = vmatprep.subr.mxu0 0.0
    %1264 = vmatpush1.msra.mxu0 0.0
    %1265 = vmatprep.subr.mxu0 0.0
    %1266 = vmatpush1.msra.mxu0 0.0
    %1267 = vmatprep.subr.mxu0 0.0
    %1268 = vmatpush1.msra.mxu0 0.0
    %1269 = vmatprep.subr.mxu0 0.0
    %1270 = vmatpush1.msra.mxu0 0.0
    %1271 = vmatprep.subr.mxu0 0.0
    %1272 = vmatpush1.msra.mxu0 0.0
    %1273 = vmatprep.subr.mxu0 0.0
    %1274 = vmatpush1.msra.mxu0 0.0
    %1275 = vmatprep.subr.mxu0 0.0
    %1276 = vmatpush1.msra.mxu0 0.0
    %1277 = vmatprep.subr.mxu0 0.0
    %1278 = vmatpush1.msra.mxu0 0.0
    %1279 = vmatprep.subr.mxu0 0.0
    %1280 = vmatpush1.msra.mxu0 0.0
    %1281 = vmatprep.subr.mxu0 0.0
    %1282 = vmatpush1.msra.mxu0 0.0
    %1283 = vmatprep.subr.mxu0 0.0
    %1284 = vmatpush1.msra.mxu0 %v1248
    %1285 = vmatprep.subr.mxu0 0.0
    %1286 = vmatpush1.msra.mxu0 %v1247
    %1287 = vmatprep.subr.mxu0 0.0
    %1288 = vmatpush1.msra.mxu0 %v1246
    %1289 = vmatprep.subr.mxu0 0.0
    %1290 = vmatpush1.msra.mxu0 %v1245
    %1291 = vmatprep.subr.mxu0 0.0
    %1292 = vmatpush2.msra.mxu0 0.0
    %1293 = vmatprep.subr.mxu0 0.0
    %1294 = vmatpush2.msra.mxu0 0.0
    %1295 = vmatprep.subr.mxu0 0.0
    %1296 = vmatpush2.msra.mxu0 0.0
    %1297 = vmatprep.subr.mxu0 0.0
    %1298 = vmatpush2.msra.mxu0 0.0
    %1299 = vmatprep.subr.mxu0 0.0
    %1300 = vmatpush2.msra.mxu0 0.0
    %1301 = vmatprep.subr.mxu0 0.0
    %1302 = vmatpush2.msra.mxu0 0.0
    %1303 = vmatprep.subr.mxu0 0.0
    %1304 = vmatpush2.msra.mxu0 0.0
    %1305 = vmatprep.subr.mxu0 0.0
    %1306 = vmatpush2.msra.mxu0 0.0
    %1307 = vmatprep.subr.mxu0 0.0
    %1308 = vmatpush2.msra.mxu0 0.0
    %1309 = vmatprep.subr.mxu0 0.0
    %1310 = vmatpush2.msra.mxu0 0.0
    %1311 = vmatprep.subr.mxu0 0.0
    %1312 = vmatpush2.msra.mxu0 0.0
    %1313 = vmatprep.subr.mxu0 0.0
    %1314 = vmatpush2.msra.mxu0 0.0
    %1315 = vmatprep.subr.mxu0 0.0
    %1316 = vmatpush2.msra.mxu0 0.0
    %1317 = vmatprep.subr.mxu0 0.0
    %1318 = vmatpush2.msra.mxu0 0.0
    %1319 = vmatprep.subr.mxu0 0.0
    %1320 = vmatpush2.msra.mxu0 0.0
    %1321 = vmatprep.subr.mxu0 0.0
    %1322 = vmatpush2.msra.mxu0 0.0
    %1323 = vmatprep.mubr.f32.mxu0 0.0
    %1324 = vmatmul.mubr.f32.gmra.mxu0 %v1257
    %v1325 = vpop.f32.mrf.mxu0
    %v1326 = vadd.f32 %v1254, %v1325
    %v1327 = vpop.f32.mrf.mxu0
    %1328 = vdwg.mxu0
    %1330 = vrot.lane.b32.xlu0 %v1241, 96
    %v1331 = vpop.permute.xlu0 %1330
    %1333 = vrot.lane.b32.xlu0 %v1244, 32
    %v1334 = vpop.permute.xlu0 %1333
    %1337 = vrot.lane.b32.xlu0 %v1326, 64
    %v1338 = vpop.permute.xlu0 %1337
    %v1340 = vsel %vm124, %v1331, %v1334
    %v1341 = vsel %vm271, %v1340, %v1338
    %1342 = vst [vmem:[#allocation7] sm:$0xff] %v1341
    // Predicated region
    $region42: #{tpu_custom_call.1} parent=1 // pred_check
      _
    $region43: #{tpu_custom_call.1} parent=1 // pred_check_branch
      %1344 = sbr.rel (0) target = $region45
    $region44: #{tpu_custom_call.1} parent=1 // pred_region
      %s1346 = ssub.s32 128, 128
      %1347 = vsyncadd [#allocation4], %s1346
      %s1349 = sshll.u32 [#allocation7], 4
      %s1350 = int_to_ptr.vmem [resolvable:$true] %s1349
      %1352 = dma.vmem_to_hbm [thread:$0]  %s1350, 128, %s8, [#allocation4]
    $region45: #{tpu_custom_call.1} parent=1 // pred_fallthru
      _
    // Predicated region
    $region46: #{tpu_custom_call.1} parent=1 // pred_check
      _
    $region47: #{tpu_custom_call.1} parent=1 // pred_check_branch
      %1354 = sbr.rel (0) target = $region49
    $region48: #{tpu_custom_call.1} parent=1 // pred_region
      %1355 = dma.done [#allocation4], 128
    $region49: #{tpu_custom_call.1} parent=1 // pred_fallthru
      _
    %1356 = vsyncpa [#allocation3], 1
    %1357 = vsyncpa [#allocation6], 1
    %1358 = vsyncpa [#allocation4], 1

</llo_original>
